<compile_context>
chip_gen: v5e
topology: v5e:2x2
jax: 0.10.0
libtpu: 0.0.40
codegen_flags: <defaults>
</compile_context>

<pallas_src>
import functools

import jax
import jax.numpy as jnp
from jax.experimental import pallas as pl
from jax.experimental.pallas import tpu as pltpu


# ----------------------------- in-kernel helpers ---------------------------- #

def _layernorm(x, g, b):
    # x: [S, H] f32, g/b: [1, H] f32
    mean = jnp.mean(x, axis=-1, keepdims=True)
    var = jnp.mean((x - mean) ** 2, axis=-1, keepdims=True)
    return (x - mean) * jax.lax.rsqrt(var + 1e-5) * g + b


# ------------------------------- Pallas kernels ----------------------------- #

def _layer_kernel(h_ref, pad_ref, ln1g_ref, ln1b_ref, wqkv_ref, bqkv_ref,
                  wo_ref, bo_ref, ln2g_ref, ln2b_ref, w1_ref, b1_ref,
                  w2_ref, b2_ref, o_ref, *, S, H, nH, Dh):
    """One full transformer layer for one batch element (pre-LN OPT block)."""
    x = h_ref[0].astype(jnp.float32)                                  # [S, H]

    # ---- self-attention block ----
    xn = _layernorm(x, ln1g_ref[...], ln1b_ref[...])                  # [S, H]

    # fused QKV projection: bf16 operands, f32 accumulation (q pre-scaled).
    qkv = jnp.dot(xn.astype(jnp.bfloat16), wqkv_ref[...],
                  preferred_element_type=jnp.float32) + bqkv_ref[...]  # [S, 3H]

    # additive mask built in-kernel: causal + key padding bias.
    neg = jnp.float32(-1e9)
    row = jax.lax.broadcasted_iota(jnp.int32, (S, S), 0)
    col = jax.lax.broadcasted_iota(jnp.int32, (S, S), 1)
    bias = jnp.where(col <= row, 0.0, neg) + pad_ref[0]               # [S, S]

    wo = wo_ref[...]                                                  # bf16 [H, H]
    attn = jnp.zeros((S, H), jnp.float32)
    for hd in range(nH):                                              # static loop
        q_h = qkv[:, hd * Dh:(hd + 1) * Dh].astype(jnp.bfloat16)      # [S, Dh]
        k_h = qkv[:, H + hd * Dh: H + (hd + 1) * Dh].astype(jnp.bfloat16)
        v_h = qkv[:, 2 * H + hd * Dh: 2 * H + (hd + 1) * Dh].astype(jnp.bfloat16)

        s = jnp.einsum("qd,kd->qk", q_h, k_h,
                       preferred_element_type=jnp.float32)            # [S, S]
        s = s + bias
        s = s - jnp.max(s, axis=-1, keepdims=True)
        p = jnp.exp(s)
        p = p * pl.reciprocal(jnp.sum(p, axis=-1, keepdims=True), approx=True)

        ctx = jnp.dot(p.astype(jnp.bfloat16), v_h,
                      preferred_element_type=jnp.float32)             # [S, Dh]
        # fused per-head output projection (== concat(heads) @ Wo).
        attn = attn + jnp.dot(ctx.astype(jnp.bfloat16),
                              wo[hd * Dh:(hd + 1) * Dh, :],
                              preferred_element_type=jnp.float32)
    attn = attn + bo_ref[...]
    x = x + attn                                                      # residual

    # ---- feed-forward block ----
    xn = _layernorm(x, ln2g_ref[...], ln2b_ref[...])
    f = jnp.dot(xn.astype(jnp.bfloat16), w1_ref[...],
                preferred_element_type=jnp.float32) + b1_ref[...]
    f = jnp.maximum(f, 0.0)
    f = jnp.dot(f.astype(jnp.bfloat16), w2_ref[...],
                preferred_element_type=jnp.float32) + b2_ref[...]
    x = x + f                                                         # residual

    o_ref[0] = x.astype(o_ref.dtype)


def _final_kernel(h_ref, g_ref, b_ref, w_ref, o_ref):
    """Final LayerNorm + lm_head (no bias) for one batch element."""
    x = h_ref[0].astype(jnp.float32)
    xn = _layernorm(x, g_ref[...], b_ref[...])
    o_ref[0] = jnp.dot(xn.astype(jnp.bfloat16), w_ref[...],
                       preferred_element_type=jnp.float32).astype(o_ref.dtype)


# ------------------------------ Pallas wrappers ----------------------------- #

def _rep_spec(shape):
    """Whole-array block replicated across the batch grid."""
    nd = len(shape)
    return pl.BlockSpec(shape, lambda b, nd=nd: (0,) * nd)


def fused_layer(h, pad_bias, lp, cfg):
    """h: [B, S, H] f32, pad_bias: [B, 1, S] f32 additive key-pad bias."""
    B, S, H = h.shape
    F = cfg.ffn
    kernel = functools.partial(_layer_kernel, S=S, H=H,
                               nH=cfg.heads, Dh=cfg.head_dim)
    return pl.pallas_call(
        kernel,
        out_shape=jax.ShapeDtypeStruct((B, S, H), h.dtype),
        grid=(B,),
        in_specs=[
            pl.BlockSpec((1, S, H), lambda b: (b, 0, 0)),   # h
            pl.BlockSpec((1, 1, S), lambda b: (b, 0, 0)),   # pad bias
            _rep_spec((1, H)), _rep_spec((1, H)),           # ln1 gamma/beta
            _rep_spec((H, 3 * H)), _rep_spec((1, 3 * H)),   # packed qkv w/b
            _rep_spec((H, H)), _rep_spec((1, H)),           # out-proj w/b
            _rep_spec((1, H)), _rep_spec((1, H)),           # ln2 gamma/beta
            _rep_spec((H, F)), _rep_spec((1, F)),           # fc1 w/b
            _rep_spec((F, H)), _rep_spec((1, H)),           # fc2 w/b
        ],
        out_specs=pl.BlockSpec((1, S, H), lambda b: (b, 0, 0)),
        compiler_params=pltpu.CompilerParams(dimension_semantics=("parallel",)),
    )(h, pad_bias, lp["ln1_g"], lp["ln1_b"], lp["wqkv"], lp["bqkv"],
      lp["wo"], lp["bo"], lp["ln2_g"], lp["ln2_b"],
      lp["w1"], lp["b1"], lp["w2"], lp["b2"])


def final_head(h, gamma, beta, w_lm):
    B, S, H = h.shape
    V = w_lm.shape[1]
    return pl.pallas_call(
        _final_kernel,
        out_shape=jax.ShapeDtypeStruct((B, S, V), jnp.float32),
        grid=(B,),
        in_specs=[
            pl.BlockSpec((1, S, H), lambda b: (b, 0, 0)),
            _rep_spec((1, H)), _rep_spec((1, H)),
            _rep_spec((H, V)),
        ],
        out_specs=pl.BlockSpec((1, S, V), lambda b: (b, 0, 0)),
        compiler_params=pltpu.CompilerParams(dimension_semantics=("parallel",)),
    )(h, gamma, beta, w_lm)


# ------------------------------- OPT-like model ------------------------------ #

class Config:
    hidden = 32
    heads = 4
    head_dim = 8
    ffn = 64
    vocab = 64
    layers = 2
    max_pos = 32          # learned positional embedding table size
    pos_offset = 2        # OPTLearnedPositionalEmbedding offset


def init_params(key, cfg):
    def norm(key, shape, scale=0.02):
        return scale * jax.random.normal(key, shape, dtype=jnp.float32)

    keys = iter(jax.random.split(key, 8 + cfg.layers * 16))
    params = {
        "pos_emb": norm(next(keys), (cfg.max_pos + cfg.pos_offset, cfg.hidden)),
        "final_ln_g": jnp.ones((cfg.hidden,), jnp.float32),
        "final_ln_b": jnp.zeros((cfg.hidden,), jnp.float32),
        "lm_head_w": norm(next(keys), (cfg.hidden, cfg.vocab)),
        "layers": [],
    }
    for _ in range(cfg.layers):
        lp = {
            "ln1_g": jnp.ones((cfg.hidden,), jnp.float32),
            "ln1_b": jnp.zeros((cfg.hidden,), jnp.float32),
            "q_w": norm(next(keys), (cfg.hidden, cfg.hidden)),
            "q_b": jnp.zeros((cfg.hidden,), jnp.float32),
            "k_w": norm(next(keys), (cfg.hidden, cfg.hidden)),
            "k_b": jnp.zeros((cfg.hidden,), jnp.float32),
            "v_w": norm(next(keys), (cfg.hidden, cfg.hidden)),
            "v_b": jnp.zeros((cfg.hidden,), jnp.float32),
            "o_w": norm(next(keys), (cfg.hidden, cfg.hidden)),
            "o_b": jnp.zeros((cfg.hidden,), jnp.float32),
            "ln2_g": jnp.ones((cfg.hidden,), jnp.float32),
            "ln2_b": jnp.zeros((cfg.hidden,), jnp.float32),
            "fc1_w": norm(next(keys), (cfg.hidden, cfg.ffn)),
            "fc1_b": jnp.zeros((cfg.ffn,), jnp.float32),
            "fc2_w": norm(next(keys), (cfg.ffn, cfg.hidden)),
            "fc2_b": jnp.zeros((cfg.hidden,), jnp.float32),
        }
        params["layers"].append(lp)
    return params


def pack_params(params, cfg):
    """One-time packing: QKV concat (scale folded into Q), bf16 MXU weights,
    f32 biases/LN params reshaped to [1, N] for lane-major broadcast."""
    scale = jnp.float32(cfg.head_dim) ** -0.5
    packed = {
        "pos_emb": params["pos_emb"],
        "final_ln_g": params["final_ln_g"].reshape(1, -1),
        "final_ln_b": params["final_ln_b"].reshape(1, -1),
        "lm_head_w": params["lm_head_w"].astype(jnp.bfloat16),
        "layers": [],
    }
    for lp in params["layers"]:
        packed["layers"].append({
            "ln1_g": lp["ln1_g"].reshape(1, -1),
            "ln1_b": lp["ln1_b"].reshape(1, -1),
            "wqkv": jnp.concatenate(
                [lp["q_w"] * scale, lp["k_w"], lp["v_w"]], axis=1
            ).astype(jnp.bfloat16),
            "bqkv": jnp.concatenate(
                [lp["q_b"] * scale, lp["k_b"], lp["v_b"]]
            ).reshape(1, -1).astype(jnp.float32),
            "wo": lp["o_w"].astype(jnp.bfloat16),
            "bo": lp["o_b"].reshape(1, -1),
            "ln2_g": lp["ln2_g"].reshape(1, -1),
            "ln2_b": lp["ln2_b"].reshape(1, -1),
            "w1": lp["fc1_w"].astype(jnp.bfloat16),
            "b1": lp["fc1_b"].reshape(1, -1),
            "w2": lp["fc2_w"].astype(jnp.bfloat16),
            "b2": lp["fc2_b"].reshape(1, -1),
        })
    return packed


def language_model_forward(packed, inputs_embeds, attention_mask, cfg):
    """inputs_embeds: [B, S, H] f32, attention_mask: [B, S] (1 = attend)."""
    B, S, H = inputs_embeds.shape

    # --- OPT learned positional embeddings (offset 2), plain-JAX glue ---
    am = attention_mask.astype(jnp.int32)
    positions = jnp.cumsum(am, axis=1) * am - 1           # padded tokens -> -1
    positions = jnp.clip(positions + cfg.pos_offset, 0,
                         cfg.max_pos + cfg.pos_offset - 1)
    pos_embeds = jnp.take(packed["pos_emb"], positions, axis=0)     # [B, S, H]

    h = (inputs_embeds + pos_embeds).astype(jnp.float32)

    # key-padding additive bias only ([B, 1, S]); causal part built in-kernel.
    pad_bias = jnp.where(attention_mask > 0, 0.0, -1e9)
    pad_bias = pad_bias.astype(jnp.float32).reshape(B, 1, S)

    for lp in packed["layers"]:
        h = fused_layer(h, pad_bias, lp, cfg)     # one pallas_call per layer

    return final_head(h, packed["final_ln_g"], packed["final_ln_b"],
                      packed["lm_head_w"])        # [B, S, V]

# TODO(synk): `generate` (autoregressive decoding / KV cache) is host-side
# control flow around this forward pass and is not implemented as a kernel.


# ----------------------------------- main ------------------------------------ #

if __name__ == "__main__":
    cfg = Config()
    B, S = 2, 8

    key = jax.random.PRNGKey(0)
    k_param, k_emb = jax.random.split(key)
    params = init_params(k_param, cfg)
    packed = pack_params(params, cfg)             # one-time weight packing

    inputs_embeds = jax.random.normal(k_emb, (B, S, cfg.hidden), dtype=jnp.float32)
    # second sequence has two padded tokens at the end
    attention_mask = jnp.array(
        [[1, 1, 1, 1, 1, 1, 1, 1],
         [1, 1, 1, 1, 1, 1, 0, 0]], dtype=jnp.int32)

    fwd = jax.jit(functools.partial(language_model_forward, cfg=cfg))
    logits = fwd(packed, inputs_embeds, attention_mask)
    jax.block_until_ready(logits)

    assert logits.shape == (B, S, cfg.vocab)
    assert jnp.all(jnp.isfinite(logits))
    print("KERNEL_OK")
</pallas_src>

<mosaic_0001>
module attributes {stable_mosaic.version = 11 : i64} {
  func.func @_final_kernel(%arg0: i32, %arg1: memref<1x8x32xf32, #tpu.memory_space<vmem>>, %arg2: memref<1x32xf32, #tpu.memory_space<vmem>>, %arg3: memref<1x32xf32, #tpu.memory_space<vmem>>, %arg4: memref<32x64xbf16, #tpu.memory_space<vmem>>, %arg5: memref<1x8x64xf32, #tpu.memory_space<vmem>>) attributes {dimension_semantics = [#tpu.dimension_semantics<parallel>], iteration_bounds = array<i64: 2>, scalar_prefetch = 0 : i64, scratch_operands = 0 : i64, tpu.core_type = #tpu.core_type<tc>, window_params = [{transform_indices = @transform_0, window_bounds = array<i64: 1, 8, 32>}, {pipeline_mode = #tpu.pipeline_mode<synchronous>, transform_indices = @transform_1, window_bounds = array<i64: 1, 32>}, {pipeline_mode = #tpu.pipeline_mode<synchronous>, transform_indices = @transform_2, window_bounds = array<i64: 1, 32>}, {pipeline_mode = #tpu.pipeline_mode<synchronous>, transform_indices = @transform_3, window_bounds = array<i64: 32, 64>}, {transform_indices = @transform_4, window_bounds = array<i64: 1, 8, 64>}]} {
    %c0 = arith.constant 0 : index
    %c0_0 = arith.constant 0 : index
    %c0_1 = arith.constant 0 : index
    %0 = vector.load %arg1[%c0, %c0_0, %c0_1] : memref<1x8x32xf32, #tpu.memory_space<vmem>>, vector<1x8x32xf32>
    %1 = vector.shape_cast %0 : vector<1x8x32xf32> to vector<8x32xf32>
    %c0_2 = arith.constant 0 : index
    %c0_3 = arith.constant 0 : index
    %2 = vector.load %arg2[%c0_2, %c0_3] : memref<1x32xf32, #tpu.memory_space<vmem>>, vector<1x32xf32>
    %c0_4 = arith.constant 0 : index
    %c0_5 = arith.constant 0 : index
    %3 = vector.load %arg3[%c0_4, %c0_5] : memref<1x32xf32, #tpu.memory_space<vmem>>, vector<1x32xf32>
    %cst = arith.constant dense<0.000000e+00> : vector<8xf32>
    %4 = vector.multi_reduction <add>, %1, %cst [1] : vector<8x32xf32> to vector<8xf32>
    %5 = vector.shape_cast %4 : vector<8xf32> to vector<8x1xf32>
    %cst_6 = arith.constant 3.200000e+01 : f32
    %6 = vector.broadcast %cst_6 : f32 to vector<8x1xf32>
    %7 = arith.divf %5, %6 : vector<8x1xf32>
    %8 = vector.broadcast %7 : vector<8x1xf32> to vector<8x32xf32>
    %9 = arith.subf %1, %8 : vector<8x32xf32>
    %10 = arith.mulf %9, %9 : vector<8x32xf32>
    %cst_7 = arith.constant dense<0.000000e+00> : vector<8xf32>
    %11 = vector.multi_reduction <add>, %10, %cst_7 [1] : vector<8x32xf32> to vector<8xf32>
    %12 = vector.shape_cast %11 : vector<8xf32> to vector<8x1xf32>
    %cst_8 = arith.constant 3.200000e+01 : f32
    %13 = vector.broadcast %cst_8 : f32 to vector<8x1xf32>
    %14 = arith.divf %12, %13 : vector<8x1xf32>
    %15 = vector.broadcast %7 : vector<8x1xf32> to vector<8x32xf32>
    %16 = arith.subf %1, %15 : vector<8x32xf32>
    %cst_9 = arith.constant 9.99999974E-6 : f32
    %17 = vector.broadcast %cst_9 : f32 to vector<8x1xf32>
    %18 = arith.addf %14, %17 : vector<8x1xf32>
    %19 = math.rsqrt %18 : vector<8x1xf32>
    %20 = vector.broadcast %19 : vector<8x1xf32> to vector<8x32xf32>
    %21 = arith.mulf %16, %20 : vector<8x32xf32>
    %22 = vector.broadcast %2 : vector<1x32xf32> to vector<8x32xf32>
    %23 = arith.mulf %21, %22 : vector<8x32xf32>
    %24 = vector.broadcast %3 : vector<1x32xf32> to vector<8x32xf32>
    %25 = arith.addf %23, %24 : vector<8x32xf32>
    %26 = arith.truncf %25 : vector<8x32xf32> to vector<8x32xbf16>
    %c0_10 = arith.constant 0 : index
    %c0_11 = arith.constant 0 : index
    %27 = vector.load %arg4[%c0_10, %c0_11] : memref<32x64xbf16, #tpu.memory_space<vmem>>, vector<32x64xbf16>
    %cst_12 = arith.constant dense<0.000000e+00> : vector<8x64xf32>
    %28 = tpu.matmul %26, %27, %cst_12 {dimension_numbers = #tpu.dot_dimension_numbers<[1], [0], [0], [1], [0, 0, 1, 1], [], []>} : vector<8x32xbf16>, vector<32x64xbf16>, vector<8x64xf32> -> vector<8x64xf32>
    %c0_13 = arith.constant 0 : index
    %c0_14 = arith.constant 0 : index
    %c0_15 = arith.constant 0 : index
    %29 = vector.load %arg5[%c0_13, %c0_14, %c0_15] : memref<1x8x64xf32, #tpu.memory_space<vmem>>, vector<1x8x64xf32>
    %30 = vector.shape_cast %29 : vector<1x8x64xf32> to vector<8x64xf32>
    %31 = vector.shape_cast %28 : vector<8x64xf32> to vector<1x8x64xf32>
    tpu.vector_store %arg5[%c0_13, %c0_14, %c0_15], %31 {strides = array<i32>} : memref<1x8x64xf32, #tpu.memory_space<vmem>>, vector<1x8x64xf32>,
    return
  }
  func.func @transform_0(%arg0: i32) -> (i32, i32, i32) {
    %c0_i32 = arith.constant 0 : i32
    %c0_i32_0 = arith.constant 0 : i32
    %c0_i32_1 = arith.constant 0 : i32
    return %arg0, %c0_i32, %c0_i32_0 : i32, i32, i32
  }
  func.func @transform_1(%arg0: i32) -> (i32, i32) {
    %c0_i32 = arith.constant 0 : i32
    %c0_i32_0 = arith.constant 0 : i32
    %c0_i32_1 = arith.constant 0 : i32
    return %c0_i32, %c0_i32_0 : i32, i32
  }
  func.func @transform_2(%arg0: i32) -> (i32, i32) {
    %c0_i32 = arith.constant 0 : i32
    %c0_i32_0 = arith.constant 0 : i32
    %c0_i32_1 = arith.constant 0 : i32
    return %c0_i32, %c0_i32_0 : i32, i32
  }
  func.func @transform_3(%arg0: i32) -> (i32, i32) {
    %c0_i32 = arith.constant 0 : i32
    %c0_i32_0 = arith.constant 0 : i32
    %c0_i32_1 = arith.constant 0 : i32
    return %c0_i32, %c0_i32_0 : i32, i32
  }
  func.func @transform_4(%arg0: i32) -> (i32, i32, i32) {
    %c0_i32 = arith.constant 0 : i32
    %c0_i32_0 = arith.constant 0 : i32
    %c0_i32_1 = arith.constant 0 : i32
    return %arg0, %c0_i32, %c0_i32_0 : i32, i32, i32
  }
}

module attributes {stable_mosaic.version = 11 : i64} {
  func.func @_layer_kernel(%arg0: i32, %arg1: memref<1x8x32xf32, #tpu.memory_space<vmem>>, %arg2: memref<1x1x8xf32, #tpu.memory_space<vmem>>, %arg3: memref<1x32xf32, #tpu.memory_space<vmem>>, %arg4: memref<1x32xf32, #tpu.memory_space<vmem>>, %arg5: memref<32x96xbf16, #tpu.memory_space<vmem>>, %arg6: memref<1x96xf32, #tpu.memory_space<vmem>>, %arg7: memref<32x32xbf16, #tpu.memory_space<vmem>>, %arg8: memref<1x32xf32, #tpu.memory_space<vmem>>, %arg9: memref<1x32xf32, #tpu.memory_space<vmem>>, %arg10: memref<1x32xf32, #tpu.memory_space<vmem>>, %arg11: memref<32x64xbf16, #tpu.memory_space<vmem>>, %arg12: memref<1x64xf32, #tpu.memory_space<vmem>>, %arg13: memref<64x32xbf16, #tpu.memory_space<vmem>>, %arg14: memref<1x32xf32, #tpu.memory_space<vmem>>, %arg15: memref<1x8x32xf32, #tpu.memory_space<vmem>>) attributes {dimension_semantics = [#tpu.dimension_semantics<parallel>], iteration_bounds = array<i64: 2>, scalar_prefetch = 0 : i64, scratch_operands = 0 : i64, tpu.core_type = #tpu.core_type<tc>, window_params = [{transform_indices = @transform_0, window_bounds = array<i64: 1, 8, 32>}, {transform_indices = @transform_1, window_bounds = array<i64: 1, 1, 8>}, {pipeline_mode = #tpu.pipeline_mode<synchronous>, transform_indices = @transform_2, window_bounds = array<i64: 1, 32>}, {pipeline_mode = #tpu.pipeline_mode<synchronous>, transform_indices = @transform_3, window_bounds = array<i64: 1, 32>}, {pipeline_mode = #tpu.pipeline_mode<synchronous>, transform_indices = @transform_4, window_bounds = array<i64: 32, 96>}, {pipeline_mode = #tpu.pipeline_mode<synchronous>, transform_indices = @transform_5, window_bounds = array<i64: 1, 96>}, {pipeline_mode = #tpu.pipeline_mode<synchronous>, transform_indices = @transform_6, window_bounds = array<i64: 32, 32>}, {pipeline_mode = #tpu.pipeline_mode<synchronous>, transform_indices = @transform_7, window_bounds = array<i64: 1, 32>}, {pipeline_mode = #tpu.pipeline_mode<synchronous>, transform_indices = @transform_8, window_bounds = array<i64: 1, 32>}, {pipeline_mode = #tpu.pipeline_mode<synchronous>, transform_indices = @transform_9, window_bounds = array<i64: 1, 32>}, {pipeline_mode = #tpu.pipeline_mode<synchronous>, transform_indices = @transform_10, window_bounds = array<i64: 32, 64>}, {pipeline_mode = #tpu.pipeline_mode<synchronous>, transform_indices = @transform_11, window_bounds = array<i64: 1, 64>}, {pipeline_mode = #tpu.pipeline_mode<synchronous>, transform_indices = @transform_12, window_bounds = array<i64: 64, 32>}, {pipeline_mode = #tpu.pipeline_mode<synchronous>, transform_indices = @transform_13, window_bounds = array<i64: 1, 32>}, {transform_indices = @transform_14, window_bounds = array<i64: 1, 8, 32>}]} {
    %c0 = arith.constant 0 : index
    %c0_0 = arith.constant 0 : index
    %c0_1 = arith.constant 0 : index
    %0 = vector.load %arg1[%c0, %c0_0, %c0_1] : memref<1x8x32xf32, #tpu.memory_space<vmem>>, vector<1x8x32xf32>
    %1 = vector.shape_cast %0 : vector<1x8x32xf32> to vector<8x32xf32>
    %c0_2 = arith.constant 0 : index
    %c0_3 = arith.constant 0 : index
    %2 = vector.load %arg3[%c0_2, %c0_3] : memref<1x32xf32, #tpu.memory_space<vmem>>, vector<1x32xf32>
    %c0_4 = arith.constant 0 : index
    %c0_5 = arith.constant 0 : index
    %3 = vector.load %arg4[%c0_4, %c0_5] : memref<1x32xf32, #tpu.memory_space<vmem>>, vector<1x32xf32>
    %cst = arith.constant dense<0.000000e+00> : vector<8xf32>
    %4 = vector.multi_reduction <add>, %1, %cst [1] : vector<8x32xf32> to vector<8xf32>
    %5 = vector.shape_cast %4 : vector<8xf32> to vector<8x1xf32>
    %cst_6 = arith.constant 3.200000e+01 : f32
    %6 = vector.broadcast %cst_6 : f32 to vector<8x1xf32>
    %7 = arith.divf %5, %6 : vector<8x1xf32>
    %8 = vector.broadcast %7 : vector<8x1xf32> to vector<8x32xf32>
    %9 = arith.subf %1, %8 : vector<8x32xf32>
    %10 = arith.mulf %9, %9 : vector<8x32xf32>
    %cst_7 = arith.constant dense<0.000000e+00> : vector<8xf32>
    %11 = vector.multi_reduction <add>, %10, %cst_7 [1] : vector<8x32xf32> to vector<8xf32>
    %12 = vector.shape_cast %11 : vector<8xf32> to vector<8x1xf32>
    %cst_8 = arith.constant 3.200000e+01 : f32
    %13 = vector.broadcast %cst_8 : f32 to vector<8x1xf32>
    %14 = arith.divf %12, %13 : vector<8x1xf32>
    %15 = vector.broadcast %7 : vector<8x1xf32> to vector<8x32xf32>
    %16 = arith.subf %1, %15 : vector<8x32xf32>
    %cst_9 = arith.constant 9.99999974E-6 : f32
    %17 = vector.broadcast %cst_9 : f32 to vector<8x1xf32>
    %18 = arith.addf %14, %17 : vector<8x1xf32>
    %19 = math.rsqrt %18 : vector<8x1xf32>
    %20 = vector.broadcast %19 : vector<8x1xf32> to vector<8x32xf32>
    %21 = arith.mulf %16, %20 : vector<8x32xf32>
    %22 = vector.broadcast %2 : vector<1x32xf32> to vector<8x32xf32>
    %23 = arith.mulf %21, %22 : vector<8x32xf32>
    %24 = vector.broadcast %3 : vector<1x32xf32> to vector<8x32xf32>
    %25 = arith.addf %23, %24 : vector<8x32xf32>
    %26 = arith.truncf %25 : vector<8x32xf32> to vector<8x32xbf16>
    %c0_10 = arith.constant 0 : index
    %c0_11 = arith.constant 0 : index
    %27 = vector.load %arg5[%c0_10, %c0_11] : memref<32x96xbf16, #tpu.memory_space<vmem>>, vector<32x96xbf16>
    %cst_12 = arith.constant dense<0.000000e+00> : vector<8x96xf32>
    %28 = tpu.matmul %26, %27, %cst_12 {dimension_numbers = #tpu.dot_dimension_numbers<[1], [0], [0], [1], [0, 0, 1, 1], [], []>} : vector<8x32xbf16>, vector<32x96xbf16>, vector<8x96xf32> -> vector<8x96xf32>
    %c0_13 = arith.constant 0 : index
    %c0_14 = arith.constant 0 : index
    %29 = vector.load %arg6[%c0_13, %c0_14] : memref<1x96xf32, #tpu.memory_space<vmem>>, vector<1x96xf32>
    %30 = vector.broadcast %29 : vector<1x96xf32> to vector<8x96xf32>
    %31 = arith.addf %28, %30 : vector<8x96xf32>
    %32 = tpu.iota {dimensions = array<i32: 0>} : vector<8x8xi32>
    %33 = tpu.iota {dimensions = array<i32: 1>} : vector<8x8xi32>
    %34 = arith.cmpi sle, %33, %32 : vector<8x8xi32>
    %cst_15 = arith.constant 0.000000e+00 : f32
    %cst_16 = arith.constant -1.000000e+09 : f32
    %35 = vector.broadcast %cst_15 : f32 to vector<8x8xf32>
    %36 = vector.broadcast %cst_16 : f32 to vector<8x8xf32>
    %37 = arith.select %34, %35, %36 : vector<8x8xi1>, vector<8x8xf32>
    %c0_17 = arith.constant 0 : index
    %c0_18 = arith.constant 0 : index
    %c0_19 = arith.constant 0 : index
    %38 = vector.load %arg2[%c0_17, %c0_18, %c0_19] : memref<1x1x8xf32, #tpu.memory_space<vmem>>, vector<1x1x8xf32>
    %39 = vector.shape_cast %38 : vector<1x1x8xf32> to vector<1x8xf32>
    %40 = vector.broadcast %39 : vector<1x8xf32> to vector<8x8xf32>
    %41 = arith.addf %37, %40 : vector<8x8xf32>
    %c0_20 = arith.constant 0 : index
    %c0_21 = arith.constant 0 : index
    %42 = vector.load %arg7[%c0_20, %c0_21] : memref<32x32xbf16, #tpu.memory_space<vmem>>, vector<32x32xbf16>
    %cst_22 = arith.constant 0.000000e+00 : f32
    %43 = vector.broadcast %cst_22 : f32 to vector<8x32xf32>
    %44 = vector.extract_strided_slice %31 {offsets = [0, 0], sizes = [8, 8], strides = [1, 1]} : vector<8x96xf32> to vector<8x8xf32>
    %45 = arith.truncf %44 : vector<8x8xf32> to vector<8x8xbf16>
    %46 = vector.extract_strided_slice %31 {offsets = [0, 32], sizes = [8, 8], strides = [1, 1]} : vector<8x96xf32> to vector<8x8xf32>
    %47 = arith.truncf %46 : vector<8x8xf32> to vector<8x8xbf16>
    %48 = vector.extract_strided_slice %31 {offsets = [0, 64], sizes = [8, 8], strides = [1, 1]} : vector<8x96xf32> to vector<8x8xf32>
    %49 = arith.truncf %48 : vector<8x8xf32> to vector<8x8xbf16>
    "tpu.trace_start"() <{level = 10 : i32, message = "qd,kd->qk"}> : () -> ()
    %cst_23 = arith.constant dense<0.000000e+00> : vector<8x8xf32>
    %50 = tpu.matmul %45, %47, %cst_23 {dimension_numbers = #tpu.dot_dimension_numbers<[1], [1], [0], [0], [0, 0, 1, 0], [], []>} : vector<8x8xbf16>, vector<8x8xbf16>, vector<8x8xf32> -> vector<8x8xf32>
    "tpu.trace_stop"() : () -> ()
    %51 = arith.addf %50, %41 : vector<8x8xf32>
    %cst_24 = arith.constant dense<0xFF800000> : vector<8xf32>
    %52 = vector.multi_reduction <maximumf>, %51, %cst_24 [1] : vector<8x8xf32> to vector<8xf32>
    %53 = vector.shape_cast %52 : vector<8xf32> to vector<8x1xf32>
    %54 = vector.broadcast %53 : vector<8x1xf32> to vector<8x8xf32>
    %55 = arith.subf %51, %54 : vector<8x8xf32>
    %56 = math.exp %55 : vector<8x8xf32>
    %cst_25 = arith.constant dense<0.000000e+00> : vector<8xf32>
    %57 = vector.multi_reduction <add>, %56, %cst_25 [1] : vector<8x8xf32> to vector<8xf32>
    %58 = vector.shape_cast %57 : vector<8xf32> to vector<8x1xf32>
    %59 = tpu.reciprocal %58 {approx = true} : vector<8x1xf32> -> vector<8x1xf32>
    %60 = vector.broadcast %59 : vector<8x1xf32> to vector<8x8xf32>
    %61 = arith.mulf %56, %60 : vector<8x8xf32>
    %62 = arith.truncf %61 : vector<8x8xf32> to vector<8x8xbf16>
    %cst_26 = arith.constant dense<0.000000e+00> : vector<8x8xf32>
    %63 = tpu.matmul %62, %49, %cst_26 {dimension_numbers = #tpu.dot_dimension_numbers<[1], [0], [0], [1], [0, 0, 1, 1], [], []>} : vector<8x8xbf16>, vector<8x8xbf16>, vector<8x8xf32> -> vector<8x8xf32>
    %64 = arith.truncf %63 : vector<8x8xf32> to vector<8x8xbf16>
    %65 = vector.extract_strided_slice %42 {offsets = [0, 0], sizes = [8, 32], strides = [1, 1]} : vector<32x32xbf16> to vector<8x32xbf16>
    %cst_27 = arith.constant dense<0.000000e+00> : vector<8x32xf32>
    %66 = tpu.matmul %64, %65, %cst_27 {dimension_numbers = #tpu.dot_dimension_numbers<[1], [0], [0], [1], [0, 0, 1, 1], [], []>} : vector<8x8xbf16>, vector<8x32xbf16>, vector<8x32xf32> -> vector<8x32xf32>
    %67 = arith.addf %43, %66 : vector<8x32xf32>
    %68 = vector.extract_strided_slice %31 {offsets = [0, 8], sizes = [8, 8], strides = [1, 1]} : vector<8x96xf32> to vector<8x8xf32>
    %69 = arith.truncf %68 : vector<8x8xf32> to vector<8x8xbf16>
    %70 = vector.extract_strided_slice %31 {offsets = [0, 40], sizes = [8, 8], strides = [1, 1]} : vector<8x96xf32> to vector<8x8xf32>
    %71 = arith.truncf %70 : vector<8x8xf32> to vector<8x8xbf16>
    %72 = vector.extract_strided_slice %31 {offsets = [0, 72], sizes = [8, 8], strides = [1, 1]} : vector<8x96xf32> to vector<8x8xf32>
    %73 = arith.truncf %72 : vector<8x8xf32> to vector<8x8xbf16>
    "tpu.trace_start"() <{level = 10 : i32, message = "qd,kd->qk"}> : () -> ()
    %cst_28 = arith.constant dense<0.000000e+00> : vector<8x8xf32>
    %74 = tpu.matmul %69, %71, %cst_28 {dimension_numbers = #tpu.dot_dimension_numbers<[1], [1], [0], [0], [0, 0, 1, 0], [], []>} : vector<8x8xbf16>, vector<8x8xbf16>, vector<8x8xf32> -> vector<8x8xf32>
    "tpu.trace_stop"() : () -> ()
    %75 = arith.addf %74, %41 : vector<8x8xf32>
    %cst_29 = arith.constant dense<0xFF800000> : vector<8xf32>
    %76 = vector.multi_reduction <maximumf>, %75, %cst_29 [1] : vector<8x8xf32> to vector<8xf32>
    %77 = vector.shape_cast %76 : vector<8xf32> to vector<8x1xf32>
    %78 = vector.broadcast %77 : vector<8x1xf32> to vector<8x8xf32>
    %79 = arith.subf %75, %78 : vector<8x8xf32>
    %80 = math.exp %79 : vector<8x8xf32>
    %cst_30 = arith.constant dense<0.000000e+00> : vector<8xf32>
    %81 = vector.multi_reduction <add>, %80, %cst_30 [1] : vector<8x8xf32> to vector<8xf32>
    %82 = vector.shape_cast %81 : vector<8xf32> to vector<8x1xf32>
    %83 = tpu.reciprocal %82 {approx = true} : vector<8x1xf32> -> vector<8x1xf32>
    %84 = vector.broadcast %83 : vector<8x1xf32> to vector<8x8xf32>
    %85 = arith.mulf %80, %84 : vector<8x8xf32>
    %86 = arith.truncf %85 : vector<8x8xf32> to vector<8x8xbf16>
    %cst_31 = arith.constant dense<0.000000e+00> : vector<8x8xf32>
    %87 = tpu.matmul %86, %73, %cst_31 {dimension_numbers = #tpu.dot_dimension_numbers<[1], [0], [0], [1], [0, 0, 1, 1], [], []>} : vector<8x8xbf16>, vector<8x8xbf16>, vector<8x8xf32> -> vector<8x8xf32>
    %88 = arith.truncf %87 : vector<8x8xf32> to vector<8x8xbf16>
    %89 = vector.extract_strided_slice %42 {offsets = [8, 0], sizes = [8, 32], strides = [1, 1]} : vector<32x32xbf16> to vector<8x32xbf16>
    %cst_32 = arith.constant dense<0.000000e+00> : vector<8x32xf32>
    %90 = tpu.matmul %88, %89, %cst_32 {dimension_numbers = #tpu.dot_dimension_numbers<[1], [0], [0], [1], [0, 0, 1, 1], [], []>} : vector<8x8xbf16>, vector<8x32xbf16>, vector<8x32xf32> -> vector<8x32xf32>
    %91 = arith.addf %67, %90 : vector<8x32xf32>
    %92 = vector.extract_strided_slice %31 {offsets = [0, 16], sizes = [8, 8], strides = [1, 1]} : vector<8x96xf32> to vector<8x8xf32>
    %93 = arith.truncf %92 : vector<8x8xf32> to vector<8x8xbf16>
    %94 = vector.extract_strided_slice %31 {offsets = [0, 48], sizes = [8, 8], strides = [1, 1]} : vector<8x96xf32> to vector<8x8xf32>
    %95 = arith.truncf %94 : vector<8x8xf32> to vector<8x8xbf16>
    %96 = vector.extract_strided_slice %31 {offsets = [0, 80], sizes = [8, 8], strides = [1, 1]} : vector<8x96xf32> to vector<8x8xf32>
    %97 = arith.truncf %96 : vector<8x8xf32> to vector<8x8xbf16>
    "tpu.trace_start"() <{level = 10 : i32, message = "qd,kd->qk"}> : () -> ()
    %cst_33 = arith.constant dense<0.000000e+00> : vector<8x8xf32>
    %98 = tpu.matmul %93, %95, %cst_33 {dimension_numbers = #tpu.dot_dimension_numbers<[1], [1], [0], [0], [0, 0, 1, 0], [], []>} : vector<8x8xbf16>, vector<8x8xbf16>, vector<8x8xf32> -> vector<8x8xf32>
    "tpu.trace_stop"() : () -> ()
    %99 = arith.addf %98, %41 : vector<8x8xf32>
    %cst_34 = arith.constant dense<0xFF800000> : vector<8xf32>
    %100 = vector.multi_reduction <maximumf>, %99, %cst_34 [1] : vector<8x8xf32> to vector<8xf32>
    %101 = vector.shape_cast %100 : vector<8xf32> to vector<8x1xf32>
    %102 = vector.broadcast %101 : vector<8x1xf32> to vector<8x8xf32>
    %103 = arith.subf %99, %102 : vector<8x8xf32>
    %104 = math.exp %103 : vector<8x8xf32>
    %cst_35 = arith.constant dense<0.000000e+00> : vector<8xf32>
    %105 = vector.multi_reduction <add>, %104, %cst_35 [1] : vector<8x8xf32> to vector<8xf32>
    %106 = vector.shape_cast %105 : vector<8xf32> to vector<8x1xf32>
    %107 = tpu.reciprocal %106 {approx = true} : vector<8x1xf32> -> vector<8x1xf32>
    %108 = vector.broadcast %107 : vector<8x1xf32> to vector<8x8xf32>
    %109 = arith.mulf %104, %108 : vector<8x8xf32>
    %110 = arith.truncf %109 : vector<8x8xf32> to vector<8x8xbf16>
    %cst_36 = arith.constant dense<0.000000e+00> : vector<8x8xf32>
    %111 = tpu.matmul %110, %97, %cst_36 {dimension_numbers = #tpu.dot_dimension_numbers<[1], [0], [0], [1], [0, 0, 1, 1], [], []>} : vector<8x8xbf16>, vector<8x8xbf16>, vector<8x8xf32> -> vector<8x8xf32>
    %112 = arith.truncf %111 : vector<8x8xf32> to vector<8x8xbf16>
    %113 = vector.extract_strided_slice %42 {offsets = [16, 0], sizes = [8, 32], strides = [1, 1]} : vector<32x32xbf16> to vector<8x32xbf16>
    %cst_37 = arith.constant dense<0.000000e+00> : vector<8x32xf32>
    %114 = tpu.matmul %112, %113, %cst_37 {dimension_numbers = #tpu.dot_dimension_numbers<[1], [0], [0], [1], [0, 0, 1, 1], [], []>} : vector<8x8xbf16>, vector<8x32xbf16>, vector<8x32xf32> -> vector<8x32xf32>
    %115 = arith.addf %91, %114 : vector<8x32xf32>
    %116 = vector.extract_strided_slice %31 {offsets = [0, 24], sizes = [8, 8], strides = [1, 1]} : vector<8x96xf32> to vector<8x8xf32>
    %117 = arith.truncf %116 : vector<8x8xf32> to vector<8x8xbf16>
    %118 = vector.extract_strided_slice %31 {offsets = [0, 56], sizes = [8, 8], strides = [1, 1]} : vector<8x96xf32> to vector<8x8xf32>
    %119 = arith.truncf %118 : vector<8x8xf32> to vector<8x8xbf16>
    %120 = vector.extract_strided_slice %31 {offsets = [0, 88], sizes = [8, 8], strides = [1, 1]} : vector<8x96xf32> to vector<8x8xf32>
    %121 = arith.truncf %120 : vector<8x8xf32> to vector<8x8xbf16>
    "tpu.trace_start"() <{level = 10 : i32, message = "qd,kd->qk"}> : () -> ()
    %cst_38 = arith.constant dense<0.000000e+00> : vector<8x8xf32>
    %122 = tpu.matmul %117, %119, %cst_38 {dimension_numbers = #tpu.dot_dimension_numbers<[1], [1], [0], [0], [0, 0, 1, 0], [], []>} : vector<8x8xbf16>, vector<8x8xbf16>, vector<8x8xf32> -> vector<8x8xf32>
    "tpu.trace_stop"() : () -> ()
    %123 = arith.addf %122, %41 : vector<8x8xf32>
    %cst_39 = arith.constant dense<0xFF800000> : vector<8xf32>
    %124 = vector.multi_reduction <maximumf>, %123, %cst_39 [1] : vector<8x8xf32> to vector<8xf32>
    %125 = vector.shape_cast %124 : vector<8xf32> to vector<8x1xf32>
    %126 = vector.broadcast %125 : vector<8x1xf32> to vector<8x8xf32>
    %127 = arith.subf %123, %126 : vector<8x8xf32>
    %128 = math.exp %127 : vector<8x8xf32>
    %cst_40 = arith.constant dense<0.000000e+00> : vector<8xf32>
    %129 = vector.multi_reduction <add>, %128, %cst_40 [1] : vector<8x8xf32> to vector<8xf32>
    %130 = vector.shape_cast %129 : vector<8xf32> to vector<8x1xf32>
    %131 = tpu.reciprocal %130 {approx = true} : vector<8x1xf32> -> vector<8x1xf32>
    %132 = vector.broadcast %131 : vector<8x1xf32> to vector<8x8xf32>
    %133 = arith.mulf %128, %132 : vector<8x8xf32>
    %134 = arith.truncf %133 : vector<8x8xf32> to vector<8x8xbf16>
    %cst_41 = arith.constant dense<0.000000e+00> : vector<8x8xf32>
    %135 = tpu.matmul %134, %121, %cst_41 {dimension_numbers = #tpu.dot_dimension_numbers<[1], [0], [0], [1], [0, 0, 1, 1], [], []>} : vector<8x8xbf16>, vector<8x8xbf16>, vector<8x8xf32> -> vector<8x8xf32>
    %136 = arith.truncf %135 : vector<8x8xf32> to vector<8x8xbf16>
    %137 = vector.extract_strided_slice %42 {offsets = [24, 0], sizes = [8, 32], strides = [1, 1]} : vector<32x32xbf16> to vector<8x32xbf16>
    %cst_42 = arith.constant dense<0.000000e+00> : vector<8x32xf32>
    %138 = tpu.matmul %136, %137, %cst_42 {dimension_numbers = #tpu.dot_dimension_numbers<[1], [0], [0], [1], [0, 0, 1, 1], [], []>} : vector<8x8xbf16>, vector<8x32xbf16>, vector<8x32xf32> -> vector<8x32xf32>
    %139 = arith.addf %115, %138 : vector<8x32xf32>
    %c0_43 = arith.constant 0 : index
    %c0_44 = arith.constant 0 : index
    %140 = vector.load %arg8[%c0_43, %c0_44] : memref<1x32xf32, #tpu.memory_space<vmem>>, vector<1x32xf32>
    %141 = vector.broadcast %140 : vector<1x32xf32> to vector<8x32xf32>
    %142 = arith.addf %139, %141 : vector<8x32xf32>
    %143 = arith.addf %1, %142 : vector<8x32xf32>
    %c0_45 = arith.constant 0 : index
    %c0_46 = arith.constant 0 : index
    %144 = vector.load %arg9[%c0_45, %c0_46] : memref<1x32xf32, #tpu.memory_space<vmem>>, vector<1x32xf32>
    %c0_47 = arith.constant 0 : index
    %c0_48 = arith.constant 0 : index
    %145 = vector.load %arg10[%c0_47, %c0_48] : memref<1x32xf32, #tpu.memory_space<vmem>>, vector<1x32xf32>
    %cst_49 = arith.constant dense<0.000000e+00> : vector<8xf32>
    %146 = vector.multi_reduction <add>, %143, %cst_49 [1] : vector<8x32xf32> to vector<8xf32>
    %147 = vector.shape_cast %146 : vector<8xf32> to vector<8x1xf32>
    %cst_50 = arith.constant 3.200000e+01 : f32
    %148 = vector.broadcast %cst_50 : f32 to vector<8x1xf32>
    %149 = arith.divf %147, %148 : vector<8x1xf32>
    %150 = vector.broadcast %149 : vector<8x1xf32> to vector<8x32xf32>
    %151 = arith.subf %143, %150 : vector<8x32xf32>
    %152 = arith.mulf %151, %151 : vector<8x32xf32>
    %cst_51 = arith.constant dense<0.000000e+00> : vector<8xf32>
    %153 = vector.multi_reduction <add>, %152, %cst_51 [1] : vector<8x32xf32> to vector<8xf32>
    %154 = vector.shape_cast %153 : vector<8xf32> to vector<8x1xf32>
    %cst_52 = arith.constant 3.200000e+01 : f32
    %155 = vector.broadcast %cst_52 : f32 to vector<8x1xf32>
    %156 = arith.divf %154, %155 : vector<8x1xf32>
    %157 = vector.broadcast %149 : vector<8x1xf32> to vector<8x32xf32>
    %158 = arith.subf %143, %157 : vector<8x32xf32>
    %cst_53 = arith.constant 9.99999974E-6 : f32
    %159 = vector.broadcast %cst_53 : f32 to vector<8x1xf32>
    %160 = arith.addf %156, %159 : vector<8x1xf32>
    %161 = math.rsqrt %160 : vector<8x1xf32>
    %162 = vector.broadcast %161 : vector<8x1xf32> to vector<8x32xf32>
    %163 = arith.mulf %158, %162 : vector<8x32xf32>
    %164 = vector.broadcast %144 : vector<1x32xf32> to vector<8x32xf32>
    %165 = arith.mulf %163, %164 : vector<8x32xf32>
    %166 = vector.broadcast %145 : vector<1x32xf32> to vector<8x32xf32>
    %167 = arith.addf %165, %166 : vector<8x32xf32>
    %168 = arith.truncf %167 : vector<8x32xf32> to vector<8x32xbf16>
    %c0_54 = arith.constant 0 : index
    %c0_55 = arith.constant 0 : index
    %169 = vector.load %arg11[%c0_54, %c0_55] : memref<32x64xbf16, #tpu.memory_space<vmem>>, vector<32x64xbf16>
    %cst_56 = arith.constant dense<0.000000e+00> : vector<8x64xf32>
    %170 = tpu.matmul %168, %169, %cst_56 {dimension_numbers = #tpu.dot_dimension_numbers<[1], [0], [0], [1], [0, 0, 1, 1], [], []>} : vector<8x32xbf16>, vector<32x64xbf16>, vector<8x64xf32> -> vector<8x64xf32>
    %c0_57 = arith.constant 0 : index
    %c0_58 = arith.constant 0 : index
    %171 = vector.load %arg12[%c0_57, %c0_58] : memref<1x64xf32, #tpu.memory_space<vmem>>, vector<1x64xf32>
    %172 = vector.broadcast %171 : vector<1x64xf32> to vector<8x64xf32>
    %173 = arith.addf %170, %172 : vector<8x64xf32>
    %cst_59 = arith.constant 0.000000e+00 : f32
    %174 = vector.broadcast %cst_59 : f32 to vector<8x64xf32>
    %175 = arith.maximumf %173, %174 : vector<8x64xf32>
    %176 = arith.truncf %175 : vector<8x64xf32> to vector<8x64xbf16>
    %c0_60 = arith.constant 0 : index
    %c0_61 = arith.constant 0 : index
    %177 = vector.load %arg13[%c0_60, %c0_61] : memref<64x32xbf16, #tpu.memory_space<vmem>>, vector<64x32xbf16>
    %cst_62 = arith.constant dense<0.000000e+00> : vector<8x32xf32>
    %178 = tpu.matmul %176, %177, %cst_62 {dimension_numbers = #tpu.dot_dimension_numbers<[1], [0], [0], [1], [0, 0, 1, 1], [], []>} : vector<8x64xbf16>, vector<64x32xbf16>, vector<8x32xf32> -> vector<8x32xf32>
    %c0_63 = arith.constant 0 : index
    %c0_64 = arith.constant 0 : index
    %179 = vector.load %arg14[%c0_63, %c0_64] : memref<1x32xf32, #tpu.memory_space<vmem>>, vector<1x32xf32>
    %180 = vector.broadcast %179 : vector<1x32xf32> to vector<8x32xf32>
    %181 = arith.addf %178, %180 : vector<8x32xf32>
    %182 = arith.addf %143, %181 : vector<8x32xf32>
    %c0_65 = arith.constant 0 : index
    %c0_66 = arith.constant 0 : index
    %c0_67 = arith.constant 0 : index
    %183 = vector.load %arg15[%c0_65, %c0_66, %c0_67] : memref<1x8x32xf32, #tpu.memory_space<vmem>>, vector<1x8x32xf32>
    %184 = vector.shape_cast %183 : vector<1x8x32xf32> to vector<8x32xf32>
    %185 = vector.shape_cast %182 : vector<8x32xf32> to vector<1x8x32xf32>
    tpu.vector_store %arg15[%c0_65, %c0_66, %c0_67], %185 {strides = array<i32>} : memref<1x8x32xf32, #tpu.memory_space<vmem>>, vector<1x8x32xf32>,
    return
  }
  func.func @transform_0(%arg0: i32) -> (i32, i32, i32) {
    %c0_i32 = arith.constant 0 : i32
    %c0_i32_0 = arith.constant 0 : i32
    %c0_i32_1 = arith.constant 0 : i32
    return %arg0, %c0_i32, %c0_i32_0 : i32, i32, i32
  }
  func.func @transform_1(%arg0: i32) -> (i32, i32, i32) {
    %c0_i32 = arith.constant 0 : i32
    %c0_i32_0 = arith.constant 0 : i32
    %c0_i32_1 = arith.constant 0 : i32
    return %arg0, %c0_i32, %c0_i32_0 : i32, i32, i32
  }
  func.func @transform_2(%arg0: i32) -> (i32, i32) {
    %c0_i32 = arith.constant 0 : i32
    %c0_i32_0 = arith.constant 0 : i32
    %c0_i32_1 = arith.constant 0 : i32
    return %c0_i32, %c0_i32_0 : i32, i32
  }
  func.func @transform_3(%arg0: i32) -> (i32, i32) {
    %c0_i32 = arith.constant 0 : i32
    %c0_i32_0 = arith.constant 0 : i32
    %c0_i32_1 = arith.constant 0 : i32
    return %c0_i32, %c0_i32_0 : i32, i32
  }
  func.func @transform_4(%arg0: i32) -> (i32, i32) {
    %c0_i32 = arith.constant 0 : i32
    %c0_i32_0 = arith.constant 0 : i32
    %c0_i32_1 = arith.constant 0 : i32
    return %c0_i32, %c0_i32_0 : i32, i32
  }
  func.func @transform_5(%arg0: i32) -> (i32, i32) {
    %c0_i32 = arith.constant 0 : i32
    %c0_i32_0 = arith.constant 0 : i32
    %c0_i32_1 = arith.constant 0 : i32
    return %c0_i32, %c0_i32_0 : i32, i32
  }
  func.func @transform_6(%arg0: i32) -> (i32, i32) {
    %c0_i32 = arith.constant 0 : i32
    %c0_i32_0 = arith.constant 0 : i32
    %c0_i32_1 = arith.constant 0 : i32
    return %c0_i32, %c0_i32_0 : i32, i32
  }
  func.func @transform_7(%arg0: i32) -> (i32, i32) {
    %c0_i32 = arith.constant 0 : i32
    %c0_i32_0 = arith.constant 0 : i32
    %c0_i32_1 = arith.constant 0 : i32
    return %c0_i32, %c0_i32_0 : i32, i32
  }
  func.func @transform_8(%arg0: i32) -> (i32, i32) {
    %c0_i32 = arith.constant 0 : i32
    %c0_i32_0 = arith.constant 0 : i32
    %c0_i32_1 = arith.constant 0 : i32
    return %c0_i32, %c0_i32_0 : i32, i32
  }
  func.func @transform_9(%arg0: i32) -> (i32, i32) {
    %c0_i32 = arith.constant 0 : i32
    %c0_i32_0 = arith.constant 0 : i32
    %c0_i32_1 = arith.constant 0 : i32
    return %c0_i32, %c0_i32_0 : i32, i32
  }
  func.func @transform_10(%arg0: i32) -> (i32, i32) {
    %c0_i32 = arith.constant 0 : i32
    %c0_i32_0 = arith.constant 0 : i32
    %c0_i32_1 = arith.constant 0 : i32
    return %c0_i32, %c0_i32_0 : i32, i32
  }
  func.func @transform_11(%arg0: i32) -> (i32, i32) {
    %c0_i32 = arith.constant 0 : i32
    %c0_i32_0 = arith.constant 0 : i32
    %c0_i32_1 = arith.constant 0 : i32
    return %c0_i32, %c0_i32_0 : i32, i32
  }
  func.func @transform_12(%arg0: i32) -> (i32, i32) {
    %c0_i32 = arith.constant 0 : i32
    %c0_i32_0 = arith.constant 0 : i32
    %c0_i32_1 = arith.constant 0 : i32
    return %c0_i32, %c0_i32_0 : i32, i32
  }
  func.func @transform_13(%arg0: i32) -> (i32, i32) {
    %c0_i32 = arith.constant 0 : i32
    %c0_i32_0 = arith.constant 0 : i32
    %c0_i32_1 = arith.constant 0 : i32
    return %c0_i32, %c0_i32_0 : i32, i32
  }
  func.func @transform_14(%arg0: i32) -> (i32, i32, i32) {
    %c0_i32 = arith.constant 0 : i32
    %c0_i32_0 = arith.constant 0 : i32
    %c0_i32_1 = arith.constant 0 : i32
    return %arg0, %c0_i32, %c0_i32_0 : i32, i32, i32
  }
}

</mosaic_0001>

<llo_original>
// kernel: language_model_forward.5
$region0: #{language_model_forward.5}
  #allocation0 [shape = 'u32[]', space=smem, size = 0x4, offset = 0x4, fixed_abs, tag = 'smem constant byte address 0x4 - core index']
  #allocation1 [shape = 'u32[72,128]{1,0:T(1,128)}', space=vmem, size = 0x9000, scoped, tag = 'internal scratch']
  %s0 = inlined_call_operand.vmem [shape: f32[2,8,32], index: 0, kind: input, shape index: {}]
  %s1 = inlined_call_operand.vmem [shape: f32[1,32], index: 1, kind: input, shape index: {}]
  %s2 = inlined_call_operand.vmem [shape: f32[1,32], index: 2, kind: input, shape index: {}]
  %s3 = inlined_call_operand.vmem [shape: bf16[32,64], index: 3, kind: input, shape index: {}]
  %s4 = inlined_call_operand.hbm [shape: f32[2,8,64], index: 4, kind: output, shape index: {}]
  %s5 = sld [smem:[#allocation0]]
  $region49: #{language_model_forward.5} parent=0
    _
  %s7 = ssub.s32 1, %s5
  %s8 = scalar_select 0, %s7, %s5
  $region1: #{language_model_forward.5} parent=0
    #allocation2 [shape = 'u8[8192]{0}', space=vmem, size = 0x2000, scoped, tag = 'output window, operand 0']
    #allocation3 [shape = 's32[2]{0}', space=sflag, size = 0x8, scoped, tag = 'scoped memory for language_model_forward.5']
    %9 = vsyncpa [#allocation3], 0
    %s10 = scalar_lea.sflag [#allocation3], 1
    %11 = vsyncpa %s10, 0
    loop: start=0, step=1, limit=4
    $region2: #{language_model_forward.5} parent=1 // loop_pre_header
      _
    $region3: #{language_model_forward.5} parent=1 // loop_header
      %s13 = sphi 0, %s17
      %p14 = scmp.ge.s32.totalorder %s13, 4
      %s23 = sphi 0, %s25
      %s26 = sphi 0, %s23
      %s27 = sphi 0, %s26
      %s43 = sphi 0, %s27
      %s47 = sphi 0, %s47
      %s49 = sphi 0, %s47
      %s50 = sphi 0, %s49
      %s64 = sphi 0, %s50
      %s68 = sphi 0, %s68
      %s70 = sphi 0, %s68
      %s71 = sphi 0, %s70
      %s85 = sphi 0, %s71
      %s89 = sphi 0, %s89
      %s91 = sphi 0, %s89
      %s92 = sphi 0, %s91
      %s106 = sphi 0, %s92
      %s112 = sphi 0, %s114
      %s115 = sphi 0, %s112
      %s116 = sphi 0, %s115
      %s132 = sphi 0, %s116
    $region4: #{language_model_forward.5} parent=1 // loop_header_branch
      %16 = sbr.rel (%p14) target = $region8
    $region5: #{language_model_forward.5} parent=1 // loop_body
      %s18 = ssub.s32 %s13, 1
      %s19 = ssub.s32 %s13, 2
      %s20 = sadd.s32 %s13, 1
      %s21 = ssub.s32 %s13, %s20
      %p22 = scmp.eq.s32.totalorder %s21, 0
      %s24 = sadd.s32 %s23, 1
      %s25 = scalar_select %p22, %s23, %s24
      %p28 = pneg %p22
      %p29 = scmp.eq.s32.totalorder %s13, 1
      %p30 = por %p28, %p29
      %p31 = scmp.ne.s32.totalorder %s23, %s26
      %p32 = scmp.eq.s32.totalorder %s13, 0
      %p33 = por %p31, %p32
      %p34 = scmp.ne.s32.totalorder %s23, %s26
      %p35 = scmp.eq.s32.totalorder %s18, 1
      %p36 = por %p34, %p35
      %p37 = scmp.ne.s32.totalorder %s26, %s27
      %p38 = scmp.eq.s32.totalorder %s18, 0
      %p39 = por %p37, %p38
      %p40 = scmp.ne.s32.totalorder %s26, %s27
      %p41 = scmp.eq.s32.totalorder %s19, 1
      %p42 = por %p40, %p41
      %p44 = scmp.ne.s32.totalorder %s27, %s43
      %p45 = scmp.eq.s32.totalorder %s19, 0
      %p46 = por %p44, %p45
      %s48 = sadd.s32 %s47, 1
      %p51 = scmp.eq.s32.totalorder %s13, 1
      %p52 = scmp.ne.s32.totalorder %s47, %s49
      %p53 = scmp.eq.s32.totalorder %s13, 0
      %p54 = por %p52, %p53
      %p55 = scmp.ne.s32.totalorder %s47, %s49
      %p56 = scmp.eq.s32.totalorder %s18, 1
      %p57 = por %p55, %p56
      %p58 = scmp.ne.s32.totalorder %s49, %s50
      %p59 = scmp.eq.s32.totalorder %s18, 0
      %p60 = por %p58, %p59
      %p61 = scmp.ne.s32.totalorder %s49, %s50
      %p62 = scmp.eq.s32.totalorder %s19, 1
      %p63 = por %p61, %p62
      %p65 = scmp.ne.s32.totalorder %s50, %s64
      %p66 = scmp.eq.s32.totalorder %s19, 0
      %p67 = por %p65, %p66
      %s69 = sadd.s32 %s68, 1
      %p72 = scmp.eq.s32.totalorder %s13, 1
      %p73 = scmp.ne.s32.totalorder %s68, %s70
      %p74 = scmp.eq.s32.totalorder %s13, 0
      %p75 = por %p73, %p74
      %p76 = scmp.ne.s32.totalorder %s68, %s70
      %p77 = scmp.eq.s32.totalorder %s18, 1
      %p78 = por %p76, %p77
      %p79 = scmp.ne.s32.totalorder %s70, %s71
      %p80 = scmp.eq.s32.totalorder %s18, 0
      %p81 = por %p79, %p80
      %p82 = scmp.ne.s32.totalorder %s70, %s71
      %p83 = scmp.eq.s32.totalorder %s19, 1
      %p84 = por %p82, %p83
      %p86 = scmp.ne.s32.totalorder %s71, %s85
      %p87 = scmp.eq.s32.totalorder %s19, 0
      %p88 = por %p86, %p87
      %s90 = sadd.s32 %s89, 1
      %p93 = scmp.eq.s32.totalorder %s13, 1
      %p94 = scmp.ne.s32.totalorder %s89, %s91
      %p95 = scmp.eq.s32.totalorder %s13, 0
      %p96 = por %p94, %p95
      %p97 = scmp.ne.s32.totalorder %s89, %s91
      %p98 = scmp.eq.s32.totalorder %s18, 1
      %p99 = por %p97, %p98
      %p100 = scmp.ne.s32.totalorder %s91, %s92
      %p101 = scmp.eq.s32.totalorder %s18, 0
      %p102 = por %p100, %p101
      %p103 = scmp.ne.s32.totalorder %s91, %s92
      %p104 = scmp.eq.s32.totalorder %s19, 1
      %p105 = por %p103, %p104
      %p107 = scmp.ne.s32.totalorder %s92, %s106
      %p108 = scmp.eq.s32.totalorder %s19, 0
      %p109 = por %p107, %p108
      %s110 = ssub.s32 %s13, %s20
      %p111 = scmp.eq.s32.totalorder %s110, 0
      %s113 = sadd.s32 %s112, 1
      %s114 = scalar_select %p111, %s112, %s113
      %p117 = pneg %p111
      %p118 = scmp.eq.s32.totalorder %s13, 1
      %p119 = por %p117, %p118
      %p120 = scmp.ne.s32.totalorder %s112, %s115
      %p121 = scmp.eq.s32.totalorder %s13, 0
      %p122 = por %p120, %p121
      %p123 = scmp.ne.s32.totalorder %s112, %s115
      %p124 = scmp.eq.s32.totalorder %s18, 1
      %p125 = por %p123, %p124
      %p126 = scmp.ne.s32.totalorder %s115, %s116
      %p127 = scmp.eq.s32.totalorder %s18, 0
      %p128 = por %p126, %p127
      %p129 = scmp.ne.s32.totalorder %s115, %s116
      %p130 = scmp.eq.s32.totalorder %s19, 1
      %p131 = por %p129, %p130
      %p133 = scmp.ne.s32.totalorder %s116, %s132
      %p134 = scmp.eq.s32.totalorder %s19, 0
      %p135 = por %p133, %p134
      %p136 = scmp.le.s32.totalorder 1, %s13
      %p137 = scmp.lt.s32.totalorder %s13, 3
      %p138 = pnand %p136, %p137
      %p139 = pneg %p138
      // Predicated region
      $region9: #{language_model_forward.5} parent=5 // pred_check
        _
      $region10: #{language_model_forward.5} parent=5 // pred_check_branch
        %141 = sbr.rel (%p138) target = $region12
      $region11: #{language_model_forward.5} parent=5 // pred_region
        %s142 = ssub.s32 %s13, 1
        // Predicated region
        $region13: #{language_model_forward.5} parent=11 // pred_check
          %p143 = pneg %p60
        $region14: #{language_model_forward.5} parent=11 // pred_check_branch
          %145 = sbr.rel (%p143) target = $region16
        $region15: #{language_model_forward.5} parent=11 // pred_region
          _
        $region16: #{language_model_forward.5} parent=11 // pred_fallthru
          _
        // Predicated region
        $region17: #{language_model_forward.5} parent=11 // pred_check
          %p146 = pneg %p81
        $region18: #{language_model_forward.5} parent=11 // pred_check_branch
          %148 = sbr.rel (%p146) target = $region20
        $region19: #{language_model_forward.5} parent=11 // pred_region
          _
        $region20: #{language_model_forward.5} parent=11 // pred_fallthru
          _
        // Predicated region
        $region21: #{language_model_forward.5} parent=11 // pred_check
          %p149 = pneg %p102
        $region22: #{language_model_forward.5} parent=11 // pred_check_branch
          %151 = sbr.rel (%p149) target = $region24
        $region23: #{language_model_forward.5} parent=11 // pred_region
          _
        $region24: #{language_model_forward.5} parent=11 // pred_fallthru
          _
      $region12: #{language_model_forward.5} parent=5 // pred_fallthru
        _
      %p152 = scmp.lt.s32.totalorder %s13, 2
      // Predicated region
      $region25: #{language_model_forward.5} parent=5 // pred_check
        %p153 = pneg %p152
      $region26: #{language_model_forward.5} parent=5 // pred_check_branch
        %155 = sbr.rel (%p153) target = $region28
      $region27: #{language_model_forward.5} parent=5 // pred_region
        // Predicated region
        $region29: #{language_model_forward.5} parent=27 // pred_check
          %p156 = pneg %p33
        $region30: #{language_model_forward.5} parent=27 // pred_check_branch
          %158 = sbr.rel (%p156) target = $region32
        $region31: #{language_model_forward.5} parent=27 // pred_region
          %p159 = scmp.lt.s32.totalorder %s13, 1
          %s160 = scalar_select %p159, %s13, 1
          %s161 = smul.addr %s160, 8
          %s162 = scalar_lea.vmem %s0, %s161
        $region32: #{language_model_forward.5} parent=27 // pred_fallthru
          _
      $region28: #{language_model_forward.5} parent=5 // pred_fallthru
        _
      %p163 = scmp.le.s32.totalorder 1, %s13
      %p164 = scmp.lt.s32.totalorder %s13, 3
      %p165 = pnand %p163, %p164
      %p166 = pneg %p165
      // Predicated region
      $region33: #{language_model_forward.5} parent=5 // pred_check
        _
      $region34: #{language_model_forward.5} parent=5 // pred_check_branch
        %168 = sbr.rel (%p165) target = $region36
      $region35: #{language_model_forward.5} parent=5 // pred_region
        %s169 = ssub.s32 %s13, 1
        %p170 = scmp.lt.s32.totalorder %s18, 1
        %s171 = scalar_select %p170, %s18, 1
        %s172 = smul.addr %s171, 8
        %s173 = scalar_lea.vmem %s0, %s172
        %p174 = pneg %p39
        %p175 = pneg %p36
        %p176 = pneg %p60
        %p177 = pneg %p57
        %p178 = pneg %p81
        %p179 = pneg %p78
        %p180 = pneg %p102
        %p181 = pneg %p99
        %p182 = pneg %p128
        %p183 = pneg %p125
        %s184 = sand.u32 %s115, 1
        %s185 = scalar_lea.sflag [#allocation3], %s184
        %s186 = sand.u32 %s115, 1
        %s187 = smul.addr %s186, 8
        %s188 = scalar_lea.vmem [#allocation2], %s187
        %p189 = scmp.lt.s32.totalorder %s18, 1
        %s190 = scalar_select %p189, %s18, 1
        %s191 = smul.addr %s190, 8
        %s192 = scalar_lea.vmem %s0, %s191
        %v194 = vld [vmem:[%s192] sm:$0xff]
        %v195 = vld [vmem:[%s1] sm:$0x1]
        %v196 = vld [vmem:[%s2] sm:$0x1]
        %vm197 = vcmask 261120
        %v198 = vsel %vm197, %v194, 0.0
        %199 = vadd.xlane.f32.xlu0 %v198
        %v200 = vpop.xlane.xlu0 %199
        %v201 = vrcp.pop 32.0
        %v202 = vmul.f32 32.0, %v201
        %v203 = vsub.f32 1.0, %v202
        %v204 = vmul.f32 %v201, %v203
        %v205 = vadd.f32 %v201, %v204
        %vm206 = vweird.f32 %v201
        %v207 = vsel %vm206, %v201, %v205
        %v208 = vmul.f32 %v200, %v207
        %v209 = vsub.f32 %v194, %v208
        %v210 = vmul.f32 %v209, %v209
        %v211 = vsel %vm197, %v210, 0.0
        %212 = vadd.xlane.f32.xlu0 %v211
        %v213 = vpop.xlane.xlu0 %212
        %v214 = vmul.f32 %v213, %v207
        %v215 = vadd.f32 %v214, 1e-05
        %v216 = vrsqrt.pop %v215
        %v217 = vmul.f32 %v216, %v215
        %v218 = vmul.f32 %v217, %v216
        %v219 = vmul.f32 0.5, %v218
        %v220 = vsub.f32 1.5, %v219
        %v221 = vmul.f32 %v216, %v220
        %vm222 = vweird.f32 %v215
        %vm223 = vweird.f32 %v216
        %vm224 = vmor %vm222, %vm223
        %v225 = vsel %vm224, %v216, %v221
        %v226 = vmul.f32 %v209, %v225
        %v228 = vperm.slane %v195, 0
        %v230 = vmul.f32 %v226, %v228
        %v232 = vperm.slane %v196, 0
        %v234 = vadd.f32 %v230, %v232
        %v235 = vpack.c.bf16 %v234, %v234
        %v236 = vld [vmem:[%s3] sm:$0xf]
        %v237 = vld [vmem:[%s3 + $0x4] sm:$0xf]
        %v238 = vld [vmem:[%s3 + $0x8] sm:$0xf]
        %v239 = vld [vmem:[%s3 + $0xc] sm:$0xf]
        %v244 = vunpack.c.l.b16 %v236
        %v245 = vunpack.c.l.b16 %v237
        %v246 = vunpack.c.l.b16 %v238
        %v247 = vunpack.c.l.b16 %v239
        %v248 = vpack.c.b16 %v245, %v244
        %v249 = vpack.c.b16 %v247, %v246
        %v253 = vsel %vm197, %v235, 0
        %255 = vmatpush.bf16.msra.mxu0 0
        %256 = vmatpush.bf16.msra.mxu0 0
        %257 = vmatpush.bf16.msra.mxu0 0
        %258 = vmatpush.bf16.msra.mxu0 0
        %259 = vmatpush.bf16.msra.mxu0 0
        %260 = vmatpush.bf16.msra.mxu0 0
        %261 = vmatpush.bf16.msra.mxu0 %v249
        %262 = vmatpush.bf16.msra.mxu0 %v248
        %263 = vmatmul.bf16.gmra.mxu0 %v253
        %v264 = vpop.f32.mrf.mxu0
        %v265 = vadd.f32 0.0, %v264
        %v266 = vpop.f32.mrf.mxu0
        %267 = vdwg.mxu0
        %vm268 = vcmask 523264
        %269 = vst.msk [vmem:[%s188] sm:$0xff] %vm268, %v265
        %s270 = sand.u32 %s115, 1
        %s271 = scalar_lea.sflag [#allocation3], %s270
        %s272 = sand.u32 %s115, 1
        %s273 = smul.addr %s272, 8
        %s274 = scalar_lea.vmem [#allocation2], %s273
        // Predicated region
        $region37: #{language_model_forward.5} parent=35 // pred_check
          %p275 = pneg %p125
        $region38: #{language_model_forward.5} parent=35 // pred_check_branch
          %277 = sbr.rel (%p275) target = $region40
        $region39: #{language_model_forward.5} parent=35 // pred_region
          %279 = vsyncadd %s271, 0
          %s280 = smul.addr %s18, 8
          %s281 = scalar_lea.hbm %s4, %s280
          %s283 = sshll.u32 %s274, 4
          %s284 = int_to_ptr.vmem [resolvable:$true] %s283
          %s285 = sshll.u32 %s281, 4
          %s286 = int_to_ptr.hbm [resolvable:$true] %s285
          %288 = dma.vmem_to_hbm [thread:$0]  %s284, 128, %s286, %s271
        $region40: #{language_model_forward.5} parent=35 // pred_fallthru
          _
      $region36: #{language_model_forward.5} parent=5 // pred_fallthru
        _
      %p289 = scmp.le.s32.totalorder 2, %s13
      // Predicated region
      $region41: #{language_model_forward.5} parent=5 // pred_check
        %p290 = pneg %p289
      $region42: #{language_model_forward.5} parent=5 // pred_check_branch
        %292 = sbr.rel (%p290) target = $region44
      $region43: #{language_model_forward.5} parent=5 // pred_region
        %s293 = ssub.s32 %s13, 2
        // Predicated region
        $region45: #{language_model_forward.5} parent=43 // pred_check
          %p294 = pneg %p131
        $region46: #{language_model_forward.5} parent=43 // pred_check_branch
          %296 = sbr.rel (%p294) target = $region48
        $region47: #{language_model_forward.5} parent=43 // pred_region
          %s297 = sand.u32 %s116, 1
          %s298 = scalar_lea.sflag [#allocation3], %s297
          %s299 = sand.u32 %s116, 1
          %s300 = smul.addr %s299, 8
          %s301 = scalar_lea.vmem [#allocation2], %s300
          %303 = dma.done %s298, 128
        $region48: #{language_model_forward.5} parent=43 // pred_fallthru
          _
      $region44: #{language_model_forward.5} parent=5 // pred_fallthru
        _
    $region6: #{language_model_forward.5} parent=1 // loop_footer
      %s17 = sadd.s32 1, %s13
    $region7: #{language_model_forward.5} parent=1 // loop_footer_branch
      %12 = sbr.rel target = $region3
    $region8: #{language_model_forward.5} parent=1 // loop_exit
      _
    %304 = vsyncpa [#allocation3], 1
    %s305 = scalar_lea.sflag [#allocation3], 1
    %306 = vsyncpa %s305, 1

// kernel: language_model_forward.3
$region0: #{language_model_forward.3}
  #allocation0 [shape = 'u32[]', space=smem, size = 0x4, offset = 0x4, fixed_abs, tag = 'smem constant byte address 0x4 - core index']
  #allocation1 [shape = 'u32[72,128]{1,0:T(1,128)}', space=vmem, size = 0x9000, scoped, tag = 'internal scratch']
  %s0 = inlined_call_operand.vmem [shape: f32[2,8,32], index: 0, kind: input, shape index: {}]
  %s1 = inlined_call_operand.vmem [shape: f32[2,1,8], index: 1, kind: input, shape index: {}]
  %s2 = inlined_call_operand.vmem [shape: f32[1,32], index: 2, kind: input, shape index: {}]
  %s3 = inlined_call_operand.vmem [shape: f32[1,32], index: 3, kind: input, shape index: {}]
  %s4 = inlined_call_operand.vmem [shape: bf16[32,96], index: 4, kind: input, shape index: {}]
  %s5 = inlined_call_operand.vmem [shape: f32[1,96], index: 5, kind: input, shape index: {}]
  %s6 = inlined_call_operand.vmem [shape: bf16[32,32], index: 6, kind: input, shape index: {}]
  %s7 = inlined_call_operand.vmem [shape: f32[1,32], index: 7, kind: input, shape index: {}]
  %s8 = inlined_call_operand.vmem [shape: f32[1,32], index: 8, kind: input, shape index: {}]
  %s9 = inlined_call_operand.vmem [shape: f32[1,32], index: 9, kind: input, shape index: {}]
  %s10 = inlined_call_operand.vmem [shape: bf16[32,64], index: 10, kind: input, shape index: {}]
  %s11 = inlined_call_operand.vmem [shape: f32[1,64], index: 11, kind: input, shape index: {}]
  %s12 = inlined_call_operand.vmem [shape: bf16[64,32], index: 12, kind: input, shape index: {}]
  %s13 = inlined_call_operand.vmem [shape: f32[1,32], index: 13, kind: input, shape index: {}]
  %s14 = inlined_call_operand.vmem [shape: f32[2,8,32], index: 14, kind: output, shape index: {}]
  %s15 = sld [smem:[#allocation0]]
  $region89: #{language_model_forward.3} parent=0
    _
  %s17 = ssub.s32 1, %s15
  %s18 = scalar_select 0, %s17, %s15
  loop: start=0, step=1, limit=4
  $region2: #{language_model_forward.3} parent=0 // loop_pre_header
    _
  $region3: #{language_model_forward.3} parent=0 // loop_header
    %s20 = sphi 0, %s24
    %p21 = scmp.ge.s32.totalorder %s20, 4
    %s30 = sphi 0, %s32
    %s33 = sphi 0, %s30
    %s34 = sphi 0, %s33
    %s50 = sphi 0, %s34
    %s56 = sphi 0, %s58
    %s59 = sphi 0, %s56
    %s60 = sphi 0, %s59
    %s76 = sphi 0, %s60
    %s80 = sphi 0, %s80
    %s82 = sphi 0, %s80
    %s83 = sphi 0, %s82
    %s97 = sphi 0, %s83
    %s101 = sphi 0, %s101
    %s103 = sphi 0, %s101
    %s104 = sphi 0, %s103
    %s118 = sphi 0, %s104
    %s122 = sphi 0, %s122
    %s124 = sphi 0, %s122
    %s125 = sphi 0, %s124
    %s139 = sphi 0, %s125
    %s143 = sphi 0, %s143
    %s145 = sphi 0, %s143
    %s146 = sphi 0, %s145
    %s160 = sphi 0, %s146
    %s164 = sphi 0, %s164
    %s166 = sphi 0, %s164
    %s167 = sphi 0, %s166
    %s181 = sphi 0, %s167
    %s185 = sphi 0, %s185
    %s187 = sphi 0, %s185
    %s188 = sphi 0, %s187
    %s202 = sphi 0, %s188
    %s206 = sphi 0, %s206
    %s208 = sphi 0, %s206
    %s209 = sphi 0, %s208
    %s223 = sphi 0, %s209
    %s227 = sphi 0, %s227
    %s229 = sphi 0, %s227
    %s230 = sphi 0, %s229
    %s244 = sphi 0, %s230
    %s248 = sphi 0, %s248
    %s250 = sphi 0, %s248
    %s251 = sphi 0, %s250
    %s265 = sphi 0, %s251
    %s269 = sphi 0, %s269
    %s271 = sphi 0, %s269
    %s272 = sphi 0, %s271
    %s286 = sphi 0, %s272
    %s290 = sphi 0, %s290
    %s292 = sphi 0, %s290
    %s293 = sphi 0, %s292
    %s307 = sphi 0, %s293
    %s311 = sphi 0, %s311
    %s313 = sphi 0, %s311
    %s314 = sphi 0, %s313
    %s328 = sphi 0, %s314
    %s334 = sphi 0, %s336
    %s337 = sphi 0, %s334
    %s338 = sphi 0, %s337
    %s354 = sphi 0, %s338
  $region4: #{language_model_forward.3} parent=0 // loop_header_branch
    %23 = sbr.rel (%p21) target = $region8
  $region5: #{language_model_forward.3} parent=0 // loop_body
    %s25 = ssub.s32 %s20, 1
    %s26 = ssub.s32 %s20, 2
    %s27 = sadd.s32 %s20, 1
    %s28 = ssub.s32 %s20, %s27
    %p29 = scmp.eq.s32.totalorder %s28, 0
    %s31 = sadd.s32 %s30, 1
    %s32 = scalar_select %p29, %s30, %s31
    %p35 = pneg %p29
    %p36 = scmp.eq.s32.totalorder %s20, 1
    %p37 = por %p35, %p36
    %p38 = scmp.ne.s32.totalorder %s30, %s33
    %p39 = scmp.eq.s32.totalorder %s20, 0
    %p40 = por %p38, %p39
    %p41 = scmp.ne.s32.totalorder %s30, %s33
    %p42 = scmp.eq.s32.totalorder %s25, 1
    %p43 = por %p41, %p42
    %p44 = scmp.ne.s32.totalorder %s33, %s34
    %p45 = scmp.eq.s32.totalorder %s25, 0
    %p46 = por %p44, %p45
    %p47 = scmp.ne.s32.totalorder %s33, %s34
    %p48 = scmp.eq.s32.totalorder %s26, 1
    %p49 = por %p47, %p48
    %p51 = scmp.ne.s32.totalorder %s34, %s50
    %p52 = scmp.eq.s32.totalorder %s26, 0
    %p53 = por %p51, %p52
    %s54 = ssub.s32 %s20, %s27
    %p55 = scmp.eq.s32.totalorder %s54, 0
    %s57 = sadd.s32 %s56, 1
    %s58 = scalar_select %p55, %s56, %s57
    %p61 = pneg %p55
    %p62 = scmp.eq.s32.totalorder %s20, 1
    %p63 = por %p61, %p62
    %p64 = scmp.ne.s32.totalorder %s56, %s59
    %p65 = scmp.eq.s32.totalorder %s20, 0
    %p66 = por %p64, %p65
    %p67 = scmp.ne.s32.totalorder %s56, %s59
    %p68 = scmp.eq.s32.totalorder %s25, 1
    %p69 = por %p67, %p68
    %p70 = scmp.ne.s32.totalorder %s59, %s60
    %p71 = scmp.eq.s32.totalorder %s25, 0
    %p72 = por %p70, %p71
    %p73 = scmp.ne.s32.totalorder %s59, %s60
    %p74 = scmp.eq.s32.totalorder %s26, 1
    %p75 = por %p73, %p74
    %p77 = scmp.ne.s32.totalorder %s60, %s76
    %p78 = scmp.eq.s32.totalorder %s26, 0
    %p79 = por %p77, %p78
    %s81 = sadd.s32 %s80, 1
    %p84 = scmp.eq.s32.totalorder %s20, 1
    %p85 = scmp.ne.s32.totalorder %s80, %s82
    %p86 = scmp.eq.s32.totalorder %s20, 0
    %p87 = por %p85, %p86
    %p88 = scmp.ne.s32.totalorder %s80, %s82
    %p89 = scmp.eq.s32.totalorder %s25, 1
    %p90 = por %p88, %p89
    %p91 = scmp.ne.s32.totalorder %s82, %s83
    %p92 = scmp.eq.s32.totalorder %s25, 0
    %p93 = por %p91, %p92
    %p94 = scmp.ne.s32.totalorder %s82, %s83
    %p95 = scmp.eq.s32.totalorder %s26, 1
    %p96 = por %p94, %p95
    %p98 = scmp.ne.s32.totalorder %s83, %s97
    %p99 = scmp.eq.s32.totalorder %s26, 0
    %p100 = por %p98, %p99
    %s102 = sadd.s32 %s101, 1
    %p105 = scmp.eq.s32.totalorder %s20, 1
    %p106 = scmp.ne.s32.totalorder %s101, %s103
    %p107 = scmp.eq.s32.totalorder %s20, 0
    %p108 = por %p106, %p107
    %p109 = scmp.ne.s32.totalorder %s101, %s103
    %p110 = scmp.eq.s32.totalorder %s25, 1
    %p111 = por %p109, %p110
    %p112 = scmp.ne.s32.totalorder %s103, %s104
    %p113 = scmp.eq.s32.totalorder %s25, 0
    %p114 = por %p112, %p113
    %p115 = scmp.ne.s32.totalorder %s103, %s104
    %p116 = scmp.eq.s32.totalorder %s26, 1
    %p117 = por %p115, %p116
    %p119 = scmp.ne.s32.totalorder %s104, %s118
    %p120 = scmp.eq.s32.totalorder %s26, 0
    %p121 = por %p119, %p120
    %s123 = sadd.s32 %s122, 1
    %p126 = scmp.eq.s32.totalorder %s20, 1
    %p127 = scmp.ne.s32.totalorder %s122, %s124
    %p128 = scmp.eq.s32.totalorder %s20, 0
    %p129 = por %p127, %p128
    %p130 = scmp.ne.s32.totalorder %s122, %s124
    %p131 = scmp.eq.s32.totalorder %s25, 1
    %p132 = por %p130, %p131
    %p133 = scmp.ne.s32.totalorder %s124, %s125
    %p134 = scmp.eq.s32.totalorder %s25, 0
    %p135 = por %p133, %p134
    %p136 = scmp.ne.s32.totalorder %s124, %s125
    %p137 = scmp.eq.s32.totalorder %s26, 1
    %p138 = por %p136, %p137
    %p140 = scmp.ne.s32.totalorder %s125, %s139
    %p141 = scmp.eq.s32.totalorder %s26, 0
    %p142 = por %p140, %p141
    %s144 = sadd.s32 %s143, 1
    %p147 = scmp.eq.s32.totalorder %s20, 1
    %p148 = scmp.ne.s32.totalorder %s143, %s145
    %p149 = scmp.eq.s32.totalorder %s20, 0
    %p150 = por %p148, %p149
    %p151 = scmp.ne.s32.totalorder %s143, %s145
    %p152 = scmp.eq.s32.totalorder %s25, 1
    %p153 = por %p151, %p152
    %p154 = scmp.ne.s32.totalorder %s145, %s146
    %p155 = scmp.eq.s32.totalorder %s25, 0
    %p156 = por %p154, %p155
    %p157 = scmp.ne.s32.totalorder %s145, %s146
    %p158 = scmp.eq.s32.totalorder %s26, 1
    %p159 = por %p157, %p158
    %p161 = scmp.ne.s32.totalorder %s146, %s160
    %p162 = scmp.eq.s32.totalorder %s26, 0
    %p163 = por %p161, %p162
    %s165 = sadd.s32 %s164, 1
    %p168 = scmp.eq.s32.totalorder %s20, 1
    %p169 = scmp.ne.s32.totalorder %s164, %s166
    %p170 = scmp.eq.s32.totalorder %s20, 0
    %p171 = por %p169, %p170
    %p172 = scmp.ne.s32.totalorder %s164, %s166
    %p173 = scmp.eq.s32.totalorder %s25, 1
    %p174 = por %p172, %p173
    %p175 = scmp.ne.s32.totalorder %s166, %s167
    %p176 = scmp.eq.s32.totalorder %s25, 0
    %p177 = por %p175, %p176
    %p178 = scmp.ne.s32.totalorder %s166, %s167
    %p179 = scmp.eq.s32.totalorder %s26, 1
    %p180 = por %p178, %p179
    %p182 = scmp.ne.s32.totalorder %s167, %s181
    %p183 = scmp.eq.s32.totalorder %s26, 0
    %p184 = por %p182, %p183
    %s186 = sadd.s32 %s185, 1
    %p189 = scmp.eq.s32.totalorder %s20, 1
    %p190 = scmp.ne.s32.totalorder %s185, %s187
    %p191 = scmp.eq.s32.totalorder %s20, 0
    %p192 = por %p190, %p191
    %p193 = scmp.ne.s32.totalorder %s185, %s187
    %p194 = scmp.eq.s32.totalorder %s25, 1
    %p195 = por %p193, %p194
    %p196 = scmp.ne.s32.totalorder %s187, %s188
    %p197 = scmp.eq.s32.totalorder %s25, 0
    %p198 = por %p196, %p197
    %p199 = scmp.ne.s32.totalorder %s187, %s188
    %p200 = scmp.eq.s32.totalorder %s26, 1
    %p201 = por %p199, %p200
    %p203 = scmp.ne.s32.totalorder %s188, %s202
    %p204 = scmp.eq.s32.totalorder %s26, 0
    %p205 = por %p203, %p204
    %s207 = sadd.s32 %s206, 1
    %p210 = scmp.eq.s32.totalorder %s20, 1
    %p211 = scmp.ne.s32.totalorder %s206, %s208
    %p212 = scmp.eq.s32.totalorder %s20, 0
    %p213 = por %p211, %p212
    %p214 = scmp.ne.s32.totalorder %s206, %s208
    %p215 = scmp.eq.s32.totalorder %s25, 1
    %p216 = por %p214, %p215
    %p217 = scmp.ne.s32.totalorder %s208, %s209
    %p218 = scmp.eq.s32.totalorder %s25, 0
    %p219 = por %p217, %p218
    %p220 = scmp.ne.s32.totalorder %s208, %s209
    %p221 = scmp.eq.s32.totalorder %s26, 1
    %p222 = por %p220, %p221
    %p224 = scmp.ne.s32.totalorder %s209, %s223
    %p225 = scmp.eq.s32.totalorder %s26, 0
    %p226 = por %p224, %p225
    %s228 = sadd.s32 %s227, 1
    %p231 = scmp.eq.s32.totalorder %s20, 1
    %p232 = scmp.ne.s32.totalorder %s227, %s229
    %p233 = scmp.eq.s32.totalorder %s20, 0
    %p234 = por %p232, %p233
    %p235 = scmp.ne.s32.totalorder %s227, %s229
    %p236 = scmp.eq.s32.totalorder %s25, 1
    %p237 = por %p235, %p236
    %p238 = scmp.ne.s32.totalorder %s229, %s230
    %p239 = scmp.eq.s32.totalorder %s25, 0
    %p240 = por %p238, %p239
    %p241 = scmp.ne.s32.totalorder %s229, %s230
    %p242 = scmp.eq.s32.totalorder %s26, 1
    %p243 = por %p241, %p242
    %p245 = scmp.ne.s32.totalorder %s230, %s244
    %p246 = scmp.eq.s32.totalorder %s26, 0
    %p247 = por %p245, %p246
    %s249 = sadd.s32 %s248, 1
    %p252 = scmp.eq.s32.totalorder %s20, 1
    %p253 = scmp.ne.s32.totalorder %s248, %s250
    %p254 = scmp.eq.s32.totalorder %s20, 0
    %p255 = por %p253, %p254
    %p256 = scmp.ne.s32.totalorder %s248, %s250
    %p257 = scmp.eq.s32.totalorder %s25, 1
    %p258 = por %p256, %p257
    %p259 = scmp.ne.s32.totalorder %s250, %s251
    %p260 = scmp.eq.s32.totalorder %s25, 0
    %p261 = por %p259, %p260
    %p262 = scmp.ne.s32.totalorder %s250, %s251
    %p263 = scmp.eq.s32.totalorder %s26, 1
    %p264 = por %p262, %p263
    %p266 = scmp.ne.s32.totalorder %s251, %s265
    %p267 = scmp.eq.s32.totalorder %s26, 0
    %p268 = por %p266, %p267
    %s270 = sadd.s32 %s269, 1
    %p273 = scmp.eq.s32.totalorder %s20, 1
    %p274 = scmp.ne.s32.totalorder %s269, %s271
    %p275 = scmp.eq.s32.totalorder %s20, 0
    %p276 = por %p274, %p275
    %p277 = scmp.ne.s32.totalorder %s269, %s271
    %p278 = scmp.eq.s32.totalorder %s25, 1
    %p279 = por %p277, %p278
    %p280 = scmp.ne.s32.totalorder %s271, %s272
    %p281 = scmp.eq.s32.totalorder %s25, 0
    %p282 = por %p280, %p281
    %p283 = scmp.ne.s32.totalorder %s271, %s272
    %p284 = scmp.eq.s32.totalorder %s26, 1
    %p285 = por %p283, %p284
    %p287 = scmp.ne.s32.totalorder %s272, %s286
    %p288 = scmp.eq.s32.totalorder %s26, 0
    %p289 = por %p287, %p288
    %s291 = sadd.s32 %s290, 1
    %p294 = scmp.eq.s32.totalorder %s20, 1
    %p295 = scmp.ne.s32.totalorder %s290, %s292
    %p296 = scmp.eq.s32.totalorder %s20, 0
    %p297 = por %p295, %p296
    %p298 = scmp.ne.s32.totalorder %s290, %s292
    %p299 = scmp.eq.s32.totalorder %s25, 1
    %p300 = por %p298, %p299
    %p301 = scmp.ne.s32.totalorder %s292, %s293
    %p302 = scmp.eq.s32.totalorder %s25, 0
    %p303 = por %p301, %p302
    %p304 = scmp.ne.s32.totalorder %s292, %s293
    %p305 = scmp.eq.s32.totalorder %s26, 1
    %p306 = por %p304, %p305
    %p308 = scmp.ne.s32.totalorder %s293, %s307
    %p309 = scmp.eq.s32.totalorder %s26, 0
    %p310 = por %p308, %p309
    %s312 = sadd.s32 %s311, 1
    %p315 = scmp.eq.s32.totalorder %s20, 1
    %p316 = scmp.ne.s32.totalorder %s311, %s313
    %p317 = scmp.eq.s32.totalorder %s20, 0
    %p318 = por %p316, %p317
    %p319 = scmp.ne.s32.totalorder %s311, %s313
    %p320 = scmp.eq.s32.totalorder %s25, 1
    %p321 = por %p319, %p320
    %p322 = scmp.ne.s32.totalorder %s313, %s314
    %p323 = scmp.eq.s32.totalorder %s25, 0
    %p324 = por %p322, %p323
    %p325 = scmp.ne.s32.totalorder %s313, %s314
    %p326 = scmp.eq.s32.totalorder %s26, 1
    %p327 = por %p325, %p326
    %p329 = scmp.ne.s32.totalorder %s314, %s328
    %p330 = scmp.eq.s32.totalorder %s26, 0
    %p331 = por %p329, %p330
    %s332 = ssub.s32 %s20, %s27
    %p333 = scmp.eq.s32.totalorder %s332, 0
    %s335 = sadd.s32 %s334, 1
    %s336 = scalar_select %p333, %s334, %s335
    %p339 = pneg %p333
    %p340 = scmp.eq.s32.totalorder %s20, 1
    %p341 = por %p339, %p340
    %p342 = scmp.ne.s32.totalorder %s334, %s337
    %p343 = scmp.eq.s32.totalorder %s20, 0
    %p344 = por %p342, %p343
    %p345 = scmp.ne.s32.totalorder %s334, %s337
    %p346 = scmp.eq.s32.totalorder %s25, 1
    %p347 = por %p345, %p346
    %p348 = scmp.ne.s32.totalorder %s337, %s338
    %p349 = scmp.eq.s32.totalorder %s25, 0
    %p350 = por %p348, %p349
    %p351 = scmp.ne.s32.totalorder %s337, %s338
    %p352 = scmp.eq.s32.totalorder %s26, 1
    %p353 = por %p351, %p352
    %p355 = scmp.ne.s32.totalorder %s338, %s354
    %p356 = scmp.eq.s32.totalorder %s26, 0
    %p357 = por %p355, %p356
    %p358 = scmp.le.s32.totalorder 1, %s20
    %p359 = scmp.lt.s32.totalorder %s20, 3
    %p360 = pnand %p358, %p359
    %p361 = pneg %p360
    // Predicated region
    $region9: #{language_model_forward.3} parent=5 // pred_check
      _
    $region10: #{language_model_forward.3} parent=5 // pred_check_branch
      %363 = sbr.rel (%p360) target = $region12
    $region11: #{language_model_forward.3} parent=5 // pred_region
      %s364 = ssub.s32 %s20, 1
      // Predicated region
      $region13: #{language_model_forward.3} parent=11 // pred_check
        %p365 = pneg %p93
      $region14: #{language_model_forward.3} parent=11 // pred_check_branch
        %367 = sbr.rel (%p365) target = $region16
      $region15: #{language_model_forward.3} parent=11 // pred_region
        _
      $region16: #{language_model_forward.3} parent=11 // pred_fallthru
        _
      // Predicated region
      $region17: #{language_model_forward.3} parent=11 // pred_check
        %p368 = pneg %p114
      $region18: #{language_model_forward.3} parent=11 // pred_check_branch
        %370 = sbr.rel (%p368) target = $region20
      $region19: #{language_model_forward.3} parent=11 // pred_region
        _
      $region20: #{language_model_forward.3} parent=11 // pred_fallthru
        _
      // Predicated region
      $region21: #{language_model_forward.3} parent=11 // pred_check
        %p371 = pneg %p135
      $region22: #{language_model_forward.3} parent=11 // pred_check_branch
        %373 = sbr.rel (%p371) target = $region24
      $region23: #{language_model_forward.3} parent=11 // pred_region
        _
      $region24: #{language_model_forward.3} parent=11 // pred_fallthru
        _
      // Predicated region
      $region25: #{language_model_forward.3} parent=11 // pred_check
        %p374 = pneg %p156
      $region26: #{language_model_forward.3} parent=11 // pred_check_branch
        %376 = sbr.rel (%p374) target = $region28
      $region27: #{language_model_forward.3} parent=11 // pred_region
        _
      $region28: #{language_model_forward.3} parent=11 // pred_fallthru
        _
      // Predicated region
      $region29: #{language_model_forward.3} parent=11 // pred_check
        %p377 = pneg %p177
      $region30: #{language_model_forward.3} parent=11 // pred_check_branch
        %379 = sbr.rel (%p377) target = $region32
      $region31: #{language_model_forward.3} parent=11 // pred_region
        _
      $region32: #{language_model_forward.3} parent=11 // pred_fallthru
        _
      // Predicated region
      $region33: #{language_model_forward.3} parent=11 // pred_check
        %p380 = pneg %p198
      $region34: #{language_model_forward.3} parent=11 // pred_check_branch
        %382 = sbr.rel (%p380) target = $region36
      $region35: #{language_model_forward.3} parent=11 // pred_region
        _
      $region36: #{language_model_forward.3} parent=11 // pred_fallthru
        _
      // Predicated region
      $region37: #{language_model_forward.3} parent=11 // pred_check
        %p383 = pneg %p219
      $region38: #{language_model_forward.3} parent=11 // pred_check_branch
        %385 = sbr.rel (%p383) target = $region40
      $region39: #{language_model_forward.3} parent=11 // pred_region
        _
      $region40: #{language_model_forward.3} parent=11 // pred_fallthru
        _
      // Predicated region
      $region41: #{language_model_forward.3} parent=11 // pred_check
        %p386 = pneg %p240
      $region42: #{language_model_forward.3} parent=11 // pred_check_branch
        %388 = sbr.rel (%p386) target = $region44
      $region43: #{language_model_forward.3} parent=11 // pred_region
        _
      $region44: #{language_model_forward.3} parent=11 // pred_fallthru
        _
      // Predicated region
      $region45: #{language_model_forward.3} parent=11 // pred_check
        %p389 = pneg %p261
      $region46: #{language_model_forward.3} parent=11 // pred_check_branch
        %391 = sbr.rel (%p389) target = $region48
      $region47: #{language_model_forward.3} parent=11 // pred_region
        _
      $region48: #{language_model_forward.3} parent=11 // pred_fallthru
        _
      // Predicated region
      $region49: #{language_model_forward.3} parent=11 // pred_check
        %p392 = pneg %p282
      $region50: #{language_model_forward.3} parent=11 // pred_check_branch
        %394 = sbr.rel (%p392) target = $region52
      $region51: #{language_model_forward.3} parent=11 // pred_region
        _
      $region52: #{language_model_forward.3} parent=11 // pred_fallthru
        _
      // Predicated region
      $region53: #{language_model_forward.3} parent=11 // pred_check
        %p395 = pneg %p303
      $region54: #{language_model_forward.3} parent=11 // pred_check_branch
        %397 = sbr.rel (%p395) target = $region56
      $region55: #{language_model_forward.3} parent=11 // pred_region
        _
      $region56: #{language_model_forward.3} parent=11 // pred_fallthru
        _
      // Predicated region
      $region57: #{language_model_forward.3} parent=11 // pred_check
        %p398 = pneg %p324
      $region58: #{language_model_forward.3} parent=11 // pred_check_branch
        %400 = sbr.rel (%p398) target = $region60
      $region59: #{language_model_forward.3} parent=11 // pred_region
        _
      $region60: #{language_model_forward.3} parent=11 // pred_fallthru
        _
    $region12: #{language_model_forward.3} parent=5 // pred_fallthru
      _
    %p401 = scmp.lt.s32.totalorder %s20, 2
    // Predicated region
    $region61: #{language_model_forward.3} parent=5 // pred_check
      %p402 = pneg %p401
    $region62: #{language_model_forward.3} parent=5 // pred_check_branch
      %404 = sbr.rel (%p402) target = $region64
    $region63: #{language_model_forward.3} parent=5 // pred_region
      // Predicated region
      $region65: #{language_model_forward.3} parent=63 // pred_check
        %p405 = pneg %p40
      $region66: #{language_model_forward.3} parent=63 // pred_check_branch
        %407 = sbr.rel (%p405) target = $region68
      $region67: #{language_model_forward.3} parent=63 // pred_region
        %p408 = scmp.lt.s32.totalorder %s20, 1
        %s409 = scalar_select %p408, %s20, 1
        %s410 = smul.addr %s409, 8
        %s411 = scalar_lea.vmem %s0, %s410
      $region68: #{language_model_forward.3} parent=63 // pred_fallthru
        _
      // Predicated region
      $region69: #{language_model_forward.3} parent=63 // pred_check
        %p412 = pneg %p66
      $region70: #{language_model_forward.3} parent=63 // pred_check_branch
        %414 = sbr.rel (%p412) target = $region72
      $region71: #{language_model_forward.3} parent=63 // pred_region
        %p415 = scmp.lt.s32.totalorder %s20, 1
        %s416 = scalar_select %p415, %s20, 1
        %s417 = scalar_lea.vmem %s1, %s416
      $region72: #{language_model_forward.3} parent=63 // pred_fallthru
        _
    $region64: #{language_model_forward.3} parent=5 // pred_fallthru
      _
    %p418 = scmp.le.s32.totalorder 1, %s20
    %p419 = scmp.lt.s32.totalorder %s20, 3
    %p420 = pnand %p418, %p419
    %p421 = pneg %p420
    // Predicated region
    $region73: #{language_model_forward.3} parent=5 // pred_check
      _
    $region74: #{language_model_forward.3} parent=5 // pred_check_branch
      %423 = sbr.rel (%p420) target = $region76
    $region75: #{language_model_forward.3} parent=5 // pred_region
      %s424 = ssub.s32 %s20, 1
      %p425 = scmp.lt.s32.totalorder %s25, 1
      %s426 = scalar_select %p425, %s25, 1
      %s427 = smul.addr %s426, 8
      %s428 = scalar_lea.vmem %s0, %s427
      %p429 = pneg %p46
      %p430 = pneg %p43
      %p431 = scmp.lt.s32.totalorder %s25, 1
      %s432 = scalar_select %p431, %s25, 1
      %s433 = scalar_lea.vmem %s1, %s432
      %p434 = pneg %p72
      %p435 = pneg %p69
      %p436 = pneg %p93
      %p437 = pneg %p90
      %p438 = pneg %p114
      %p439 = pneg %p111
      %p440 = pneg %p135
      %p441 = pneg %p132
      %p442 = pneg %p156
      %p443 = pneg %p153
      %p444 = pneg %p177
      %p445 = pneg %p174
      %p446 = pneg %p198
      %p447 = pneg %p195
      %p448 = pneg %p219
      %p449 = pneg %p216
      %p450 = pneg %p240
      %p451 = pneg %p237
      %p452 = pneg %p261
      %p453 = pneg %p258
      %p454 = pneg %p282
      %p455 = pneg %p279
      %p456 = pneg %p303
      %p457 = pneg %p300
      %p458 = pneg %p324
      %p459 = pneg %p321
      %p460 = pneg %p350
      %p461 = pneg %p347
      %p462 = scmp.lt.s32.totalorder %s25, 1
      %s463 = scalar_select %p462, %s25, 1
      %s464 = smul.addr %s463, 8
      %s465 = scalar_lea.vmem %s14, %s464
      %p466 = scmp.lt.s32.totalorder %s25, 1
      %s467 = scalar_select %p466, %s25, 1
      %s468 = smul.addr %s467, 8
      %s469 = scalar_lea.vmem %s0, %s468
      %p470 = scmp.lt.s32.totalorder %s25, 1
      %s471 = scalar_select %p470, %s25, 1
      %s472 = scalar_lea.vmem %s1, %s471
      %p473 = scmp.lt.s32.totalorder %s25, 1
      %s474 = scalar_select %p473, %s25, 1
      %s475 = smul.addr %s474, 8
      %s476 = scalar_lea.vmem %s14, %s475
      %v478 = vld [vmem:[%s469] sm:$0xff]
      %v479 = vld [vmem:[%s2] sm:$0x1]
      %v480 = vld [vmem:[%s3] sm:$0x1]
      %vm481 = vcmask 261120
      %v482 = vsel %vm481, %v478, 0.0
      %483 = vadd.xlane.f32.xlu0 %v482
      %v484 = vpop.xlane.xlu0 %483
      %v485 = vrcp.pop 32.0
      %v486 = vmul.f32 32.0, %v485
      %v487 = vsub.f32 1.0, %v486
      %v488 = vmul.f32 %v485, %v487
      %v489 = vadd.f32 %v485, %v488
      %vm490 = vweird.f32 %v485
      %v491 = vsel %vm490, %v485, %v489
      %v492 = vmul.f32 %v484, %v491
      %v493 = vsub.f32 %v478, %v492
      %v494 = vmul.f32 %v493, %v493
      %v495 = vsel %vm481, %v494, 0.0
      %496 = vadd.xlane.f32.xlu0 %v495
      %v497 = vpop.xlane.xlu0 %496
      %v498 = vmul.f32 %v497, %v491
      %v499 = vadd.f32 %v498, 1e-05
      %v500 = vrsqrt.pop %v499
      %v501 = vmul.f32 %v500, %v499
      %v502 = vmul.f32 %v501, %v500
      %v503 = vmul.f32 0.5, %v502
      %v504 = vsub.f32 1.5, %v503
      %v505 = vmul.f32 %v500, %v504
      %vm506 = vweird.f32 %v499
      %vm507 = vweird.f32 %v500
      %vm508 = vmor %vm506, %vm507
      %v509 = vsel %vm508, %v500, %v505
      %v510 = vmul.f32 %v493, %v509
      %v512 = vperm.slane %v479, 0
      %v514 = vmul.f32 %v510, %v512
      %v516 = vperm.slane %v480, 0
      %v518 = vadd.f32 %v514, %v516
      %v519 = vpack.c.bf16 %v518, %v518
      %v520 = vld [vmem:[%s4] sm:$0xf]
      %v521 = vld [vmem:[%s4 + $0x4] sm:$0xf]
      %v522 = vld [vmem:[%s4 + $0x8] sm:$0xf]
      %v523 = vld [vmem:[%s4 + $0xc] sm:$0xf]
      %v524 = vld [vmem:[%s5] sm:$0x1]
      %v526 = vperm.slane %v524, 0
      %v532 = vunpack.c.l.b16 %v520
      %v533 = vunpack.c.l.b16 %v521
      %v534 = vunpack.c.l.b16 %v522
      %v535 = vunpack.c.l.b16 %v523
      %v536 = vpack.c.b16 %v533, %v532
      %v537 = vpack.c.b16 %v535, %v534
      %v541 = vsel %vm481, %v519, 0
      %543 = vmatpush.bf16.msra.mxu0 0
      %544 = vmatpush.bf16.msra.mxu0 0
      %545 = vmatpush.bf16.msra.mxu0 0
      %546 = vmatpush.bf16.msra.mxu0 0
      %547 = vmatpush.bf16.msra.mxu0 0
      %548 = vmatpush.bf16.msra.mxu0 0
      %549 = vmatpush.bf16.msra.mxu0 %v537
      %550 = vmatpush.bf16.msra.mxu0 %v536
      %551 = vmatmul.bf16.gmra.mxu0 %v541
      %v552 = vpop.f32.mrf.mxu0
      %v553 = vadd.f32 %v526, %v552
      %v554 = vpop.f32.mrf.mxu0
      %555 = vdwg.mxu0
      %v556 = vlaneseq
      %v557 = vshrl.u32 %v556, 7
      %v558 = vlaneseq
      %v559 = vand.u32 %v558, 127
      %vm560 = vcmp.le.s32.totalorder %v559, %v557
      %v561 = vsel %vm560, 0.0, -1e+09
      %v562 = vld [vmem:[%s472] sm:$0x1]
      %v564 = vperm.slane %v562, 0
      %v566 = vadd.f32 %v561, %v564
      %v567 = vld [vmem:[%s6] sm:$0xf]
      %v568 = vld [vmem:[%s6 + $0x4] sm:$0xf]
      %v569 = vld [vmem:[%s6 + $0x8] sm:$0xf]
      %v570 = vld [vmem:[%s6 + $0xc] sm:$0xf]
      %v571 = vpack.c.bf16 %v553, %v553
      %573 = vrot.lane.b32.xlu0 %v571, 96
      %v574 = vpop.permute.xlu0 %573
      %vm575 = vcmask 64512
      %v577 = vsel %vm575, %v571, 0
      %v580 = vsel %vm575, %v574, 0
      %582 = vmatpush.bf16.xpose.msra.mxu0 0
      %583 = vmatpush.bf16.xpose.msra.mxu0 0
      %584 = vmatpush.bf16.xpose.msra.mxu0 0
      %585 = vmatpush.bf16.xpose.msra.mxu0 0
      %586 = vmatpush.bf16.xpose.msra.mxu0 0
      %587 = vmatpush.bf16.xpose.msra.mxu0 0
      %588 = vmatpush.bf16.xpose.msra.mxu0 0
      %589 = vmatpush.bf16.xpose.msra.mxu0 %v580
      %590 = vmatmul.bf16.gmra.mxu0 %v577
      %v591 = vpop.f32.mrf.mxu0
      %v592 = vadd.f32 %v566, %v591
      %v593 = vpop.f32.mrf.mxu0
      %594 = vdwg.mxu0
      %v595 = vsel %vm575, %v592, -inf
      %596 = vmax.xlane.f32.xlu0 %v595
      %v597 = vpop.xlane.xlu0 %596
      %v598 = vsub.f32 %v592, %v597
      %v599 = vmul.f32 %v598, 1.442695
      %v600 = vpow.pop %v599
      %v601 = vsel %vm575, %v600, 0.0
      %602 = vadd.xlane.f32.xlu0 %v601
      %v603 = vpop.xlane.xlu0 %602
      %v604 = vrcp.pop %v603
      %v605 = vmul.f32 %v600, %v604
      %v606 = vpack.c.bf16 %v605, %v605
      %607 = vrot.lane.b32.xlu0 %v571, 64
      %v608 = vpop.permute.xlu0 %607
      %v610 = vsel %vm575, %v606, 0
      %vm612 = vcmask 1043456
      %v614 = vsel %vm612, %v608, 0
      %616 = vmatpush.bf16.msra.mxu0 0
      %617 = vmatpush.bf16.msra.mxu0 0
      %618 = vmatpush.bf16.msra.mxu0 0
      %619 = vmatpush.bf16.msra.mxu0 0
      %620 = vmatpush.bf16.msra.mxu0 0
      %621 = vmatpush.bf16.msra.mxu0 0
      %622 = vmatpush.bf16.msra.mxu0 0
      %623 = vmatpush.bf16.msra.mxu0 %v614
      %624 = vmatmul.bf16.gmra.mxu0 %v610
      %v625 = vpop.f32.mrf.mxu0
      %v626 = vadd.f32 0.0, %v625
      %v627 = vpop.f32.mrf.mxu0
      %628 = vdwg.mxu0
      %v629 = vpack.c.bf16 %v626, %v626
      %630 = vrot.lane.b32.xlu0 %v571, 120
      %v631 = vpop.permute.xlu0 %630
      %632 = vrot.lane.b32.xlu0 %v571, 88
      %v633 = vpop.permute.xlu0 %632
      %v635 = vsel %vm575, %v631, 0
      %v638 = vsel %vm575, %v633, 0
      %640 = vmatpush.bf16.xpose.msra.mxu0 0
      %641 = vmatpush.bf16.xpose.msra.mxu0 0
      %642 = vmatpush.bf16.xpose.msra.mxu0 0
      %643 = vmatpush.bf16.xpose.msra.mxu0 0
      %644 = vmatpush.bf16.xpose.msra.mxu0 0
      %645 = vmatpush.bf16.xpose.msra.mxu0 0
      %646 = vmatpush.bf16.xpose.msra.mxu0 0
      %647 = vmatpush.bf16.xpose.msra.mxu0 %v638
      %648 = vmatmul.bf16.gmra.mxu0 %v635
      %v649 = vpop.f32.mrf.mxu0
      %v650 = vadd.f32 %v566, %v649
      %v651 = vpop.f32.mrf.mxu0
      %652 = vdwg.mxu0
      %v653 = vsel %vm575, %v650, -inf
      %654 = vmax.xlane.f32.xlu0 %v653
      %v655 = vpop.xlane.xlu0 %654
      %v656 = vsub.f32 %v650, %v655
      %v657 = vmul.f32 %v656, 1.442695
      %v658 = vpow.pop %v657
      %v659 = vsel %vm575, %v658, 0.0
      %660 = vadd.xlane.f32.xlu0 %v659
      %v661 = vpop.xlane.xlu0 %660
      %v662 = vrcp.pop %v661
      %v663 = vmul.f32 %v658, %v662
      %v664 = vpack.c.bf16 %v663, %v663
      %665 = vrot.lane.b32.xlu0 %v571, 56
      %v666 = vpop.permute.xlu0 %665
      %v668 = vsel %vm575, %v664, 0
      %v671 = vsel %vm612, %v666, 0
      %673 = vmatpush.bf16.msra.mxu0 0
      %674 = vmatpush.bf16.msra.mxu0 0
      %675 = vmatpush.bf16.msra.mxu0 0
      %676 = vmatpush.bf16.msra.mxu0 0
      %677 = vmatpush.bf16.msra.mxu0 0
      %678 = vmatpush.bf16.msra.mxu0 0
      %679 = vmatpush.bf16.msra.mxu0 0
      %680 = vmatpush.bf16.msra.mxu0 %v671
      %681 = vmatmul.bf16.gmra.mxu0 %v668
      %v682 = vpop.f32.mrf.mxu0
      %v683 = vadd.f32 0.0, %v682
      %v684 = vpop.f32.mrf.mxu0
      %685 = vdwg.mxu0
      %v686 = vpack.c.bf16 %v683, %v683
      %v688 = vsel %vm575, %v686, 0
      %v691 = vsel %vm612, %v568, 0
      %693 = vmatpush.bf16.msra.mxu0 0
      %694 = vmatpush.bf16.msra.mxu0 0
      %695 = vmatpush.bf16.msra.mxu0 0
      %696 = vmatpush.bf16.msra.mxu0 0
      %697 = vmatpush.bf16.msra.mxu0 0
      %698 = vmatpush.bf16.msra.mxu0 0
      %699 = vmatpush.bf16.msra.mxu0 0
      %700 = vmatpush.bf16.msra.mxu0 %v691
      %701 = vmatmul.bf16.gmra.mxu0 %v688
      %v702 = vpop.f32.mrf.mxu0
      %v703 = vadd.f32 0.0, %v702
      %v704 = vpop.f32.mrf.mxu0
      %705 = vdwg.mxu0
      %v707 = vsel %vm575, %v629, 0
      %v710 = vsel %vm612, %v567, 0
      %712 = vmatpush.bf16.msra.mxu0 0
      %713 = vmatpush.bf16.msra.mxu0 0
      %714 = vmatpush.bf16.msra.mxu0 0
      %715 = vmatpush.bf16.msra.mxu0 0
      %716 = vmatpush.bf16.msra.mxu0 0
      %717 = vmatpush.bf16.msra.mxu0 0
      %718 = vmatpush.bf16.msra.mxu0 0
      %719 = vmatpush.bf16.msra.mxu0 %v710
      %720 = vmatmul.bf16.gmra.mxu0 %v707
      %v721 = vpop.f32.mrf.mxu0
      %v722 = vadd.f32 %v703, %v721
      %v723 = vpop.f32.mrf.mxu0
      %724 = vdwg.mxu0
      %725 = vrot.lane.b32.xlu0 %v571, 112
      %v726 = vpop.permute.xlu0 %725
      %727 = vrot.lane.b32.xlu0 %v571, 80
      %v728 = vpop.permute.xlu0 %727
      %v730 = vsel %vm575, %v726, 0
      %v733 = vsel %vm575, %v728, 0
      %735 = vmatpush.bf16.xpose.msra.mxu0 0
      %736 = vmatpush.bf16.xpose.msra.mxu0 0
      %737 = vmatpush.bf16.xpose.msra.mxu0 0
      %738 = vmatpush.bf16.xpose.msra.mxu0 0
      %739 = vmatpush.bf16.xpose.msra.mxu0 0
      %740 = vmatpush.bf16.xpose.msra.mxu0 0
      %741 = vmatpush.bf16.xpose.msra.mxu0 0
      %742 = vmatpush.bf16.xpose.msra.mxu0 %v733
      %743 = vmatmul.bf16.gmra.mxu0 %v730
      %v744 = vpop.f32.mrf.mxu0
      %v745 = vadd.f32 %v566, %v744
      %v746 = vpop.f32.mrf.mxu0
      %747 = vdwg.mxu0
      %v748 = vsel %vm575, %v745, -inf
      %749 = vmax.xlane.f32.xlu0 %v748
      %v750 = vpop.xlane.xlu0 %749
      %v751 = vsub.f32 %v745, %v750
      %v752 = vmul.f32 %v751, 1.442695
      %v753 = vpow.pop %v752
      %v754 = vsel %vm575, %v753, 0.0
      %755 = vadd.xlane.f32.xlu0 %v754
      %v756 = vpop.xlane.xlu0 %755
      %v757 = vrcp.pop %v756
      %v758 = vmul.f32 %v753, %v757
      %v759 = vpack.c.bf16 %v758, %v758
      %760 = vrot.lane.b32.xlu0 %v571, 48
      %v761 = vpop.permute.xlu0 %760
      %v763 = vsel %vm575, %v759, 0
      %v766 = vsel %vm612, %v761, 0
      %768 = vmatpush.bf16.msra.mxu0 0
      %769 = vmatpush.bf16.msra.mxu0 0
      %770 = vmatpush.bf16.msra.mxu0 0
      %771 = vmatpush.bf16.msra.mxu0 0
      %772 = vmatpush.bf16.msra.mxu0 0
      %773 = vmatpush.bf16.msra.mxu0 0
      %774 = vmatpush.bf16.msra.mxu0 0
      %775 = vmatpush.bf16.msra.mxu0 %v766
      %776 = vmatmul.bf16.gmra.mxu0 %v763
      %v777 = vpop.f32.mrf.mxu0
      %v778 = vadd.f32 0.0, %v777
      %v779 = vpop.f32.mrf.mxu0
      %780 = vdwg.mxu0
      %v781 = vpack.c.bf16 %v778, %v778
      %v783 = vsel %vm575, %v781, 0
      %v786 = vsel %vm612, %v569, 0
      %788 = vmatpush.bf16.msra.mxu0 0
      %789 = vmatpush.bf16.msra.mxu0 0
      %790 = vmatpush.bf16.msra.mxu0 0
      %791 = vmatpush.bf16.msra.mxu0 0
      %792 = vmatpush.bf16.msra.mxu0 0
      %793 = vmatpush.bf16.msra.mxu0 0
      %794 = vmatpush.bf16.msra.mxu0 0
      %795 = vmatpush.bf16.msra.mxu0 %v786
      %796 = vmatmul.bf16.gmra.mxu0 %v783
      %v797 = vpop.f32.mrf.mxu0
      %v798 = vadd.f32 0.0, %v797
      %v799 = vpop.f32.mrf.mxu0
      %800 = vdwg.mxu0
      %v801 = vadd.f32 %v722, %v798
      %802 = vrot.lane.b32.xlu0 %v571, 104
      %v803 = vpop.permute.xlu0 %802
      %804 = vrot.lane.b32.xlu0 %v571, 72
      %v805 = vpop.permute.xlu0 %804
      %v807 = vsel %vm575, %v803, 0
      %v810 = vsel %vm575, %v805, 0
      %812 = vmatpush.bf16.xpose.msra.mxu0 0
      %813 = vmatpush.bf16.xpose.msra.mxu0 0
      %814 = vmatpush.bf16.xpose.msra.mxu0 0
      %815 = vmatpush.bf16.xpose.msra.mxu0 0
      %816 = vmatpush.bf16.xpose.msra.mxu0 0
      %817 = vmatpush.bf16.xpose.msra.mxu0 0
      %818 = vmatpush.bf16.xpose.msra.mxu0 0
      %819 = vmatpush.bf16.xpose.msra.mxu0 %v810
      %820 = vmatmul.bf16.gmra.mxu0 %v807
      %v821 = vpop.f32.mrf.mxu0
      %v822 = vadd.f32 %v566, %v821
      %v823 = vpop.f32.mrf.mxu0
      %824 = vdwg.mxu0
      %v825 = vsel %vm575, %v822, -inf
      %826 = vmax.xlane.f32.xlu0 %v825
      %v827 = vpop.xlane.xlu0 %826
      %v828 = vsub.f32 %v822, %v827
      %v829 = vmul.f32 %v828, 1.442695
      %v830 = vpow.pop %v829
      %v831 = vsel %vm575, %v830, 0.0
      %832 = vadd.xlane.f32.xlu0 %v831
      %v833 = vpop.xlane.xlu0 %832
      %v834 = vrcp.pop %v833
      %v835 = vmul.f32 %v830, %v834
      %v836 = vpack.c.bf16 %v835, %v835
      %837 = vrot.lane.b32.xlu0 %v571, 40
      %v838 = vpop.permute.xlu0 %837
      %v840 = vsel %vm575, %v836, 0
      %v843 = vsel %vm612, %v838, 0
      %845 = vmatpush.bf16.msra.mxu0 0
      %846 = vmatpush.bf16.msra.mxu0 0
      %847 = vmatpush.bf16.msra.mxu0 0
      %848 = vmatpush.bf16.msra.mxu0 0
      %849 = vmatpush.bf16.msra.mxu0 0
      %850 = vmatpush.bf16.msra.mxu0 0
      %851 = vmatpush.bf16.msra.mxu0 0
      %852 = vmatpush.bf16.msra.mxu0 %v843
      %853 = vmatmul.bf16.gmra.mxu0 %v840
      %v854 = vpop.f32.mrf.mxu0
      %v855 = vadd.f32 0.0, %v854
      %v856 = vpop.f32.mrf.mxu0
      %857 = vdwg.mxu0
      %v858 = vpack.c.bf16 %v855, %v855
      %v860 = vsel %vm575, %v858, 0
      %v863 = vsel %vm612, %v570, 0
      %865 = vmatpush.bf16.msra.mxu0 0
      %866 = vmatpush.bf16.msra.mxu0 0
      %867 = vmatpush.bf16.msra.mxu0 0
      %868 = vmatpush.bf16.msra.mxu0 0
      %869 = vmatpush.bf16.msra.mxu0 0
      %870 = vmatpush.bf16.msra.mxu0 0
      %871 = vmatpush.bf16.msra.mxu0 0
      %872 = vmatpush.bf16.msra.mxu0 %v863
      %873 = vmatmul.bf16.gmra.mxu0 %v860
      %v874 = vpop.f32.mrf.mxu0
      %v875 = vadd.f32 0.0, %v874
      %v876 = vpop.f32.mrf.mxu0
      %877 = vdwg.mxu0
      %v878 = vadd.f32 %v801, %v875
      %v879 = vld [vmem:[%s7] sm:$0x1]
      %v881 = vperm.slane %v879, 0
      %v883 = vadd.f32 %v878, %v881
      %v884 = vadd.f32 %v478, %v883
      %v885 = vld [vmem:[%s8] sm:$0x1]
      %v886 = vld [vmem:[%s9] sm:$0x1]
      %v887 = vsel %vm481, %v884, 0.0
      %888 = vadd.xlane.f32.xlu0 %v887
      %v889 = vpop.xlane.xlu0 %888
      %v890 = vmul.f32 %v889, %v491
      %v891 = vsub.f32 %v884, %v890
      %v892 = vmul.f32 %v891, %v891
      %v893 = vsel %vm481, %v892, 0.0
      %894 = vadd.xlane.f32.xlu0 %v893
      %v895 = vpop.xlane.xlu0 %894
      %v896 = vmul.f32 %v895, %v491
      %v897 = vadd.f32 %v896, 1e-05
      %v898 = vrsqrt.pop %v897
      %v899 = vmul.f32 %v898, %v897
      %v900 = vmul.f32 %v899, %v898
      %v901 = vmul.f32 0.5, %v900
      %v902 = vsub.f32 1.5, %v901
      %v903 = vmul.f32 %v898, %v902
      %vm904 = vweird.f32 %v897
      %vm905 = vweird.f32 %v898
      %vm906 = vmor %vm904, %vm905
      %v907 = vsel %vm906, %v898, %v903
      %v908 = vmul.f32 %v891, %v907
      %v910 = vperm.slane %v885, 0
      %v912 = vmul.f32 %v908, %v910
      %v914 = vperm.slane %v886, 0
      %v916 = vadd.f32 %v912, %v914
      %v917 = vpack.c.bf16 %v916, %v916
      %v918 = vld [vmem:[%s10] sm:$0xf]
      %v919 = vld [vmem:[%s10 + $0x4] sm:$0xf]
      %v920 = vld [vmem:[%s10 + $0x8] sm:$0xf]
      %v921 = vld [vmem:[%s10 + $0xc] sm:$0xf]
      %v922 = vld [vmem:[%s11] sm:$0x1]
      %v924 = vperm.slane %v922, 0
      %v930 = vunpack.c.l.b16 %v918
      %v931 = vunpack.c.l.b16 %v919
      %v932 = vunpack.c.l.b16 %v920
      %v933 = vunpack.c.l.b16 %v921
      %v934 = vpack.c.b16 %v931, %v930
      %v935 = vpack.c.b16 %v933, %v932
      %v939 = vsel %vm481, %v917, 0
      %941 = vmatpush.bf16.msra.mxu0 0
      %942 = vmatpush.bf16.msra.mxu0 0
      %943 = vmatpush.bf16.msra.mxu0 0
      %944 = vmatpush.bf16.msra.mxu0 0
      %945 = vmatpush.bf16.msra.mxu0 0
      %946 = vmatpush.bf16.msra.mxu0 0
      %947 = vmatpush.bf16.msra.mxu0 %v935
      %948 = vmatpush.bf16.msra.mxu0 %v934
      %949 = vmatmul.bf16.gmra.mxu0 %v939
      %v950 = vpop.f32.mrf.mxu0
      %v951 = vadd.f32 %v924, %v950
      %v952 = vpop.f32.mrf.mxu0
      %953 = vdwg.mxu0
      %v954 = vmax.f32 %v951, 0.0
      %v955 = vpack.c.bf16 %v954, %v954
      %v956 = vld [vmem:[%s12] sm:$0xf]
      %v957 = vld [vmem:[%s12 + $0x4] sm:$0xf]
      %v958 = vld [vmem:[%s12 + $0x8] sm:$0xf]
      %v959 = vld [vmem:[%s12 + $0xc] sm:$0xf]
      %v960 = vld [vmem:[%s12 + $0x10] sm:$0xf]
      %v961 = vld [vmem:[%s12 + $0x14] sm:$0xf]
      %v962 = vld [vmem:[%s12 + $0x18] sm:$0xf]
      %v963 = vld [vmem:[%s12 + $0x1c] sm:$0xf]
      %v964 = vld [vmem:[%s13] sm:$0x1]
      %v966 = vperm.slane %v964, 0
      %v976 = vunpack.c.l.b16 %v956
      %v977 = vunpack.c.l.b16 %v957
      %v978 = vunpack.c.l.b16 %v958
      %v979 = vunpack.c.l.b16 %v959
      %v980 = vunpack.c.l.b16 %v960
      %v981 = vunpack.c.l.b16 %v961
      %v982 = vunpack.c.l.b16 %v962
      %v983 = vunpack.c.l.b16 %v963
      %v984 = vpack.c.b16 %v977, %v976
      %v985 = vpack.c.b16 %v979, %v978
      %v986 = vpack.c.b16 %v981, %v980
      %v987 = vpack.c.b16 %v983, %v982
      %vm992 = vcmask 523264
      %v994 = vsel %vm992, %v955, 0
      %996 = vmatpush.bf16.msra.mxu0 0
      %997 = vmatpush.bf16.msra.mxu0 0
      %998 = vmatpush.bf16.msra.mxu0 0
      %999 = vmatpush.bf16.msra.mxu0 0
      %1000 = vmatpush.bf16.msra.mxu0 %v987
      %1001 = vmatpush.bf16.msra.mxu0 %v986
      %1002 = vmatpush.bf16.msra.mxu0 %v985
      %1003 = vmatpush.bf16.msra.mxu0 %v984
      %1004 = vmatmul.bf16.gmra.mxu0 %v994
      %v1005 = vpop.f32.mrf.mxu0
      %v1006 = vadd.f32 %v966, %v1005
      %v1007 = vpop.f32.mrf.mxu0
      %1008 = vdwg.mxu0
      %v1009 = vadd.f32 %v884, %v1006
      %1010 = vst.msk [vmem:[%s476] sm:$0xff] %vm481, %v1009
      %p1011 = scmp.lt.s32.totalorder %s25, 1
      %s1012 = scalar_select %p1011, %s25, 1
      %s1013 = smul.addr %s1012, 8
      %s1014 = scalar_lea.vmem %s14, %s1013
      // Predicated region
      $region77: #{language_model_forward.3} parent=75 // pred_check
        %p1015 = pneg %p347
      $region78: #{language_model_forward.3} parent=75 // pred_check_branch
        %1017 = sbr.rel (%p1015) target = $region80
      $region79: #{language_model_forward.3} parent=75 // pred_region
        _
      $region80: #{language_model_forward.3} parent=75 // pred_fallthru
        _
    $region76: #{language_model_forward.3} parent=5 // pred_fallthru
      _
    %p1018 = scmp.le.s32.totalorder 2, %s20
    // Predicated region
    $region81: #{language_model_forward.3} parent=5 // pred_check
      %p1019 = pneg %p1018
    $region82: #{language_model_forward.3} parent=5 // pred_check_branch
      %1021 = sbr.rel (%p1019) target = $region84
    $region83: #{language_model_forward.3} parent=5 // pred_region
      %s1022 = ssub.s32 %s20, 2
      // Predicated region
      $region85: #{language_model_forward.3} parent=83 // pred_check
        %p1023 = pneg %p353
      $region86: #{language_model_forward.3} parent=83 // pred_check_branch
        %1025 = sbr.rel (%p1023) target = $region88
      $region87: #{language_model_forward.3} parent=83 // pred_region
        %p1026 = scmp.lt.s32.totalorder %s26, 1
        %s1027 = scalar_select %p1026, %s26, 1
        %s1028 = smul.addr %s1027, 8
        %s1029 = scalar_lea.vmem %s14, %s1028
      $region88: #{language_model_forward.3} parent=83 // pred_fallthru
        _
    $region84: #{language_model_forward.3} parent=5 // pred_fallthru
      _
  $region6: #{language_model_forward.3} parent=0 // loop_footer
    %s24 = sadd.s32 1, %s20
  $region7: #{language_model_forward.3} parent=0 // loop_footer_branch
    %19 = sbr.rel target = $region3
  $region8: #{language_model_forward.3} parent=0 // loop_exit
    _

</llo_original>
